<compile_context>
chip_gen: v7x
topology: tpu7x:2x2x1
jax: 0.10.0
libtpu: 0.0.40
codegen_flags: <defaults>
</compile_context>

<pallas_src>
import functools

import jax
import jax.numpy as jnp
import numpy as np
from jax.experimental import pallas as pl
from jax.experimental.pallas import tpu as pltpu

EPS = 1e-5  # torch LayerNorm / InstanceNorm1d default eps


def _gelu_exact(x):
    # nn.GELU default (erf-based).  Kept exact even in fast mode (matches PyTorch);
    # it is normally hidden under MXU time.
    return 0.5 * x * (1.0 + jax.lax.erf(x * 0.7071067811865476))


def _instance_norm_over_len(x):
    # torch InstanceNorm1d on (B, C, N): normalize over N (here axis 0 of (L, C)), biased var.
    mu = jnp.mean(x, axis=0, keepdims=True)
    var = jnp.mean((x - mu) ** 2, axis=0, keepdims=True)
    return (x - mu) * jax.lax.rsqrt(var + EPS)


def _fusion_kernel(txt_ref, img_ref, mask_ref, bias_ref,
                   wvp_ref, bvp_ref,
                   wq_ref, bq_ref,
                   wk_ref, bk_ref,
                   wv_ref, bv_ref,
                   ww_ref, bw_ref,
                   wm_ref, bm_ref,
                   gamma_ref, beta_ref,
                   out_ref,
                   q_sc, acc_sc,
                   *, approx_recip, attn_dtype):
    h = pl.program_id(1)
    last_h = pl.num_programs(1) - 1
    d_model = txt_ref.shape[-1]
    scale = float(d_model) ** -0.5

    # ---- once per batch element (first HW tile): query path + accumulator init ----
    @pl.when(h == 0)
    def _init():
        txt = txt_ref[0]                                                     # (L, D) f32
        q0 = jnp.dot(txt, wq_ref[...], preferred_element_type=jnp.float32) + bq_ref[...]
        q = _instance_norm_over_len(q0) * mask_ref[0]                        # (L, D)
        # Fold the d_model**-0.5 scale into q; stored bf16 in fast mode so the sim
        # matmul reads a native bf16 operand directly.
        q_sc[...] = (q * scale).astype(q_sc.dtype)
        acc_sc[...] = jnp.zeros_like(acc_sc)

    # ---- per HW tile: vis_project, f_key / f_value, masked softmax over L ----
    img = img_ref[0]                                                         # (Th, V)
    vis = _gelu_exact(
        jnp.dot(img, wvp_ref[...], preferred_element_type=jnp.float32) + bvp_ref[...]
    )                                                                        # (Th, V) f32
    vis_c = vis.astype(wk_ref.dtype)                                         # bf16 in fast mode
    key = jnp.dot(vis_c, wk_ref[...], preferred_element_type=jnp.float32) + bk_ref[...]  # (Th, D)
    val = jnp.dot(vis_c, wv_ref[...], preferred_element_type=jnp.float32) + bv_ref[...]  # (Th, D)

    # sim[hw, l] = scale * <key[hw,:], q[l,:]> + 10000*(mask[l]-1) — contract D directly,
    # bf16 operands / f32 accumulation in fast mode.
    sim = jax.lax.dot_general(key.astype(attn_dtype), q_sc[...],
                              (((1,), (1,)), ((), ())),
                              preferred_element_type=jnp.float32)            # (Th, L)
    sim = sim + bias_ref[0]                                                  # (1, L) additive bias
    # NOTE: a batch element with every text position masked gets a uniform softmax over
    # -10000 logits (not zeros) — identical to the PyTorch graph, do not "fix" here.
    sim = sim - jnp.max(sim, axis=-1, keepdims=True)
    e = jnp.exp(sim)
    p = e * pl.reciprocal(jnp.sum(e, axis=-1, keepdims=True), approx=approx_recip)

    # out[l, d] += sum_hw p[hw, l] * val[hw, d] — contract the tile axis, no transpose;
    # bf16 operands, f32 accumulator.
    acc_sc[...] += jax.lax.dot_general(p.astype(attn_dtype), val.astype(attn_dtype),
                                       (((0,), (0,)), ((), ())),
                                       preferred_element_type=jnp.float32)   # (L, D)

    # ---- once per batch element (last HW tile): W + InstanceNorm, mm, project_mm, ln_1 ----
    @pl.when(h == last_h)
    def _finish():
        txt = txt_ref[0]
        o0 = jnp.dot(acc_sc[...], ww_ref[...], preferred_element_type=jnp.float32) + bw_ref[...]
        lang = _instance_norm_over_len(o0)                                   # (L, D)
        mm = txt * lang
        mm = _gelu_exact(
            jnp.dot(mm, wm_ref[...], preferred_element_type=jnp.float32) + bm_ref[...]
        )                                                                    # (L, D)
        mu = jnp.mean(mm, axis=-1, keepdims=True)
        var = jnp.mean((mm - mu) ** 2, axis=-1, keepdims=True)
        out_ref[0] = (mm - mu) * jax.lax.rsqrt(var + EPS) * gamma_ref[...] + beta_ref[...]


def _pick_hw_tile(hw, vis_dim, img_itemsize, requested, img_buffers,
                  img_budget_bytes=16 * 1024 * 1024):
    """Largest 256/128-friendly tile whose pipelined image buffers fit a VMEM budget."""
    if requested is not None:
        if hw % requested != 0 or not (requested == hw or requested % 8 == 0):
            raise ValueError("hw_tile must divide HW and be a multiple of 8 (or equal HW)")
        return requested
    if hw % 8 != 0:
        return hw
    for t in (1024, 512, 256, 128, 64, 32, 16, 8):
        if hw % t == 0 and (t == 8 or img_buffers * t * vis_dim * img_itemsize <= img_budget_bytes):
            return t
    return hw


def _vmem_footprint_bytes(L, D, V, t_hw, img_itemsize, q_itemsize, img_buffers, flat_params):
    weights = sum(int(np.prod(p.shape)) * np.dtype(p.dtype).itemsize for p in flat_params)
    img = img_buffers * t_hw * V * img_itemsize          # pipelined image tiles
    txt = 2 * L * D * 4                                  # text block (double-buffered)
    masks = 2 * (L + L) * 4                              # mask + additive bias blocks
    out = 2 * L * D * 4                                  # output block
    scratch = L * D * q_itemsize + L * D * 4             # q scratch + f32 accumulator
    return weights + img + txt + masks + out + scratch


def prepare_params(params, *, fast=True):
    """Pre-transpose weights (kernel computes x @ Wt) and cast the heavy image-path
    weights to bf16 in fast mode.  Call ONCE at model-load time, OUTSIDE jit: doing the
    V x V / V x D transpose+cast per call is pure HBM overhead on every generation."""
    heavy = jnp.bfloat16 if fast else jnp.float32
    wt = lambda w, dt=jnp.float32: jnp.asarray(w).T.astype(dt)
    f32 = lambda w: jnp.asarray(w, dtype=jnp.float32)
    return (
        wt(params["wvp"], heavy), f32(params["bvp"]),
        wt(params["wq"]), f32(params["bq"]),
        wt(params["wk"], heavy), f32(params["bk"]),
        wt(params["wv"], heavy), f32(params["bv"]),
        wt(params["ww"]), f32(params["bw"]),
        wt(params["wm"]), f32(params["bm"]),
        f32(params["gamma"]), f32(params["beta"]),
    )


def text_residual_attention_block(prepared_params, text, image, text_mask, *,
                                  hw_tile=None, fast=True, img_buffers=2):
    """text: (L, B, D) f32, image: (B, HW, V) f32, text_mask: (B, L, 1) -> (mm (L,B,D), image).

    `prepared_params` must come from prepare_params(...) with the same `fast` flag."""
    L, B, D = text.shape
    _, HW, V = image.shape
    img_dtype = jnp.bfloat16 if fast else jnp.float32
    q_dtype = jnp.bfloat16 if fast else jnp.float32
    img_itemsize = np.dtype(img_dtype).itemsize
    t_hw = _pick_hw_tile(HW, V, img_itemsize, hw_tile, img_buffers)
    n_hw = HW // t_hw

    txt_bld = jnp.transpose(text, (1, 0, 2)).astype(jnp.float32)           # (B, L, D)
    # fast mode rounds the image itself to bf16 (halves the image-tile DMA); vis_project's
    # GEMM then runs bf16 x bf16 with f32 accumulation.  Documented precision relaxation.
    img_in = image.astype(img_dtype)
    mask = text_mask.astype(jnp.float32)                                   # (B, L, 1)
    # additive softmax bias, lane-dense over L, precomputed outside the kernel
    bias = 10000.0 * (jnp.transpose(mask, (0, 2, 1)) - 1.0)                # (B, 1, L)

    flat_params = tuple(prepared_params)

    img_idx = lambda b, h: (b, h, 0)
    if img_buffers == 2:
        img_spec = pl.BlockSpec((1, t_hw, V), img_idx)                     # default double-buffer
    else:
        # use only if a profile shows the image-tile DMA exposed (small V)
        img_spec = pl.BlockSpec((1, t_hw, V), img_idx, pipeline_mode=pl.Buffered(img_buffers))

    in_specs = [
        pl.BlockSpec((1, L, D), lambda b, h: (b, 0, 0)),        # text (resident over h)
        img_spec,                                               # image tile (pipelined)
        pl.BlockSpec((1, L, 1), lambda b, h: (b, 0, 0)),        # mask for query
        pl.BlockSpec((1, 1, L), lambda b, h: (b, 0, 0)),        # additive mask bias
    ] + [pl.BlockSpec(memory_space=pltpu.MemorySpace.VMEM)      # weights: single-buffered,
         for _ in flat_params]                                  # loaded once for the whole grid

    # VMEM request: actual footprint + 8 MiB headroom, capped at 48 MiB so v7x's 64 MiB
    # physical VMEM keeps room for Mosaic scratch (v5e/v6e have 128 MiB so the cap is safe).
    footprint = _vmem_footprint_bytes(L, D, V, t_hw, img_itemsize,
                                      np.dtype(q_dtype).itemsize, img_buffers, flat_params)
    vmem_limit = footprint + 8 * 1024 * 1024
    vmem_limit = min(max(vmem_limit, 16 * 1024 * 1024), 48 * 1024 * 1024)
    vmem_limit = max(vmem_limit, footprint + 2 * 1024 * 1024)

    mm_bld = pl.pallas_call(
        functools.partial(_fusion_kernel, approx_recip=fast,
                          attn_dtype=jnp.bfloat16 if fast else jnp.float32),
        out_shape=jax.ShapeDtypeStruct((B, L, D), jnp.float32),
        grid=(B, n_hw),
        in_specs=in_specs,
        out_specs=pl.BlockSpec((1, L, D), lambda b, h: (b, 0, 0)),
        scratch_shapes=[pltpu.VMEM((L, D), q_dtype),            # scaled/masked query (bf16 in fast)
                        pltpu.VMEM((L, D), jnp.float32)],       # attention-output accumulator
        compiler_params=pltpu.CompilerParams(
            dimension_semantics=("parallel", "arbitrary"),
            vmem_limit_bytes=int(vmem_limit),
        ),
    )(txt_bld, img_in, mask, bias, *flat_params)

    mm = jnp.transpose(mm_bld, (1, 0, 2))                                   # (L, B, D)
    # TODO(synk): the PyTorch forward also computes `text + attn(ln_1(text))` and the MLP
    # residual, but that tensor is never returned (only (mm, image) are), so it is omitted.
    # TODO(synk): v7x megacore — if production B is 1 (or odd), split the HW axis across the
    # two TensorCores (per-core partial (L,D) accumulators + tiny combine) instead of relying
    # on the batch "parallel" axis alone.
    return mm, image


# ---------------- pure-JAX f32 reference (mirrors the PyTorch graph) ----------------
def _ref_single(params, txt, img, mask):
    d_model = txt.shape[-1]
    vis = _gelu_exact(img @ params["wvp"].T + params["bvp"])
    q = _instance_norm_over_len(txt @ params["wq"].T + params["bq"]) * mask
    key = vis @ params["wk"].T + params["bk"]
    val = vis @ params["wv"].T + params["bv"]
    sim = (key @ q.T) * (float(d_model) ** -0.5) + 10000.0 * (mask.T - 1.0)
    p = jax.nn.softmax(sim, axis=-1)
    out = p.T @ val
    lang = _instance_norm_over_len(out @ params["ww"].T + params["bw"])
    mm = _gelu_exact((txt * lang) @ params["wm"].T + params["bm"])
    mu = jnp.mean(mm, axis=-1, keepdims=True)
    var = jnp.mean((mm - mu) ** 2, axis=-1, keepdims=True)
    return (mm - mu) * jax.lax.rsqrt(var + EPS) * params["gamma"] + params["beta"]


def _ref(params, text, image, text_mask):
    txt_bld = jnp.transpose(text, (1, 0, 2))
    mm_bld = jax.vmap(_ref_single, in_axes=(None, 0, 0, 0))(params, txt_bld, image, text_mask)
    return jnp.transpose(mm_bld, (1, 0, 2))


def init_params(key, d_model, vis_dim):
    ks = jax.random.split(key, 12)
    w = lambda k, shape: (0.15 * jax.random.normal(k, shape)).astype(jnp.float32)
    return dict(
        wvp=w(ks[0], (vis_dim, vis_dim)), bvp=w(ks[1], (1, vis_dim)),
        wq=w(ks[2], (d_model, d_model)), bq=w(ks[3], (1, d_model)),
        wk=w(ks[4], (d_model, vis_dim)), bk=w(ks[5], (1, d_model)),
        wv=w(ks[6], (d_model, vis_dim)), bv=w(ks[7], (1, d_model)),
        ww=w(ks[8], (d_model, d_model)), bw=w(ks[9], (1, d_model)),
        wm=w(ks[10], (d_model, d_model)), bm=w(ks[11], (1, d_model)),
        gamma=jnp.ones((1, d_model), jnp.float32),
        beta=jnp.zeros((1, d_model), jnp.float32),
    )


if __name__ == "__main__":
    B, L, D, HW, V = 2, 8, 32, 16, 64  # batch, seq, d_model, spatial, vis_dim

    root = jax.random.PRNGKey(0)
    kp, kt, ki = jax.random.split(root, 3)
    params = init_params(kp, D, V)

    text = jax.random.normal(kt, (L, B, D), jnp.float32)      # (seq, batch, d_model)
    image = jax.random.normal(ki, (B, HW, V), jnp.float32)    # (batch, HW, vis_dim)
    lengths = jnp.array([L, L - 3])
    text_mask = (jnp.arange(L)[None, :] < lengths[:, None]).astype(jnp.float32)[..., None]  # (B,L,1)

    # Prepare weights ONCE, outside the jitted call path (one set per precision mode).
    prep_f32 = prepare_params(params, fast=False)
    prep_fast = prepare_params(params, fast=True)

    fwd = jax.jit(text_residual_attention_block,
                  static_argnames=("hw_tile", "fast", "img_buffers"))
    mm_ref = jax.block_until_ready(_ref(params, text, image, text_mask))

    # Accuracy mode (all-f32 matmuls, exact reciprocal): strict check; hw_tile=8 exercises
    # the 2-step HW accumulation path.
    mm32, img_out = jax.block_until_ready(
        fwd(prep_f32, text, image, text_mask, hw_tile=8, fast=False))
    np.testing.assert_allclose(np.asarray(mm32), np.asarray(mm_ref), rtol=2e-4, atol=2e-4)
    np.testing.assert_allclose(np.asarray(img_out), np.asarray(image), rtol=0, atol=0)

    # Fast mode: bf16 operands on ALL image-path + attention GEMMs (f32 accumulation),
    # bf16 image input, approx reciprocal — looser tolerance by design; the strict
    # numerical check is the f32 path above.
    mm_fast, _ = jax.block_until_ready(
        fwd(prep_fast, text, image, text_mask, hw_tile=8, fast=True))
    np.testing.assert_allclose(np.asarray(mm_fast), np.asarray(mm_ref), rtol=1e-1, atol=1e-1)

    assert mm_fast.shape == (L, B, D) and img_out.shape == (B, HW, V)
    print("KERNEL_OK")
</pallas_src>

<mosaic_0001>
module attributes {stable_mosaic.version = 11 : i64} {
  func.func @_fusion_kernel(%arg0: i32, %arg1: i32, %arg2: memref<1x8x32xf32, #tpu.memory_space<vmem>>, %arg3: memref<1x8x64xf32, #tpu.memory_space<vmem>>, %arg4: memref<1x8x1xf32, #tpu.memory_space<vmem>>, %arg5: memref<1x1x8xf32, #tpu.memory_space<vmem>>, %arg6: memref<64x64xf32, #tpu.memory_space<vmem>>, %arg7: memref<1x64xf32, #tpu.memory_space<vmem>>, %arg8: memref<32x32xf32, #tpu.memory_space<vmem>>, %arg9: memref<1x32xf32, #tpu.memory_space<vmem>>, %arg10: memref<64x32xf32, #tpu.memory_space<vmem>>, %arg11: memref<1x32xf32, #tpu.memory_space<vmem>>, %arg12: memref<64x32xf32, #tpu.memory_space<vmem>>, %arg13: memref<1x32xf32, #tpu.memory_space<vmem>>, %arg14: memref<32x32xf32, #tpu.memory_space<vmem>>, %arg15: memref<1x32xf32, #tpu.memory_space<vmem>>, %arg16: memref<32x32xf32, #tpu.memory_space<vmem>>, %arg17: memref<1x32xf32, #tpu.memory_space<vmem>>, %arg18: memref<1x32xf32, #tpu.memory_space<vmem>>, %arg19: memref<1x32xf32, #tpu.memory_space<vmem>>, %arg20: memref<1x8x32xf32, #tpu.memory_space<vmem>>, %arg21: memref<8x32xf32, #tpu.memory_space<vmem>>, %arg22: memref<8x32xf32, #tpu.memory_space<vmem>>) attributes {dimension_semantics = [#tpu.dimension_semantics<parallel>, #tpu.dimension_semantics<arbitrary>], iteration_bounds = array<i64: 2, 2>, scalar_prefetch = 0 : i64, scratch_operands = 2 : i64, tpu.core_type = #tpu.core_type<tc>, window_params = [{transform_indices = @transform_0, window_bounds = array<i64: 1, 8, 32>}, {transform_indices = @transform_1, window_bounds = array<i64: 1, 8, 64>}, {transform_indices = @transform_2, window_bounds = array<i64: 1, 8, 1>}, {transform_indices = @transform_3, window_bounds = array<i64: 1, 1, 8>}, {pipeline_mode = #tpu.pipeline_mode<synchronous>, transform_indices = @transform_4, window_bounds = array<i64: 64, 64>}, {pipeline_mode = #tpu.pipeline_mode<synchronous>, transform_indices = @transform_5, window_bounds = array<i64: 1, 64>}, {pipeline_mode = #tpu.pipeline_mode<synchronous>, transform_indices = @transform_6, window_bounds = array<i64: 32, 32>}, {pipeline_mode = #tpu.pipeline_mode<synchronous>, transform_indices = @transform_7, window_bounds = array<i64: 1, 32>}, {pipeline_mode = #tpu.pipeline_mode<synchronous>, transform_indices = @transform_8, window_bounds = array<i64: 64, 32>}, {pipeline_mode = #tpu.pipeline_mode<synchronous>, transform_indices = @transform_9, window_bounds = array<i64: 1, 32>}, {pipeline_mode = #tpu.pipeline_mode<synchronous>, transform_indices = @transform_10, window_bounds = array<i64: 64, 32>}, {pipeline_mode = #tpu.pipeline_mode<synchronous>, transform_indices = @transform_11, window_bounds = array<i64: 1, 32>}, {pipeline_mode = #tpu.pipeline_mode<synchronous>, transform_indices = @transform_12, window_bounds = array<i64: 32, 32>}, {pipeline_mode = #tpu.pipeline_mode<synchronous>, transform_indices = @transform_13, window_bounds = array<i64: 1, 32>}, {pipeline_mode = #tpu.pipeline_mode<synchronous>, transform_indices = @transform_14, window_bounds = array<i64: 32, 32>}, {pipeline_mode = #tpu.pipeline_mode<synchronous>, transform_indices = @transform_15, window_bounds = array<i64: 1, 32>}, {pipeline_mode = #tpu.pipeline_mode<synchronous>, transform_indices = @transform_16, window_bounds = array<i64: 1, 32>}, {pipeline_mode = #tpu.pipeline_mode<synchronous>, transform_indices = @transform_17, window_bounds = array<i64: 1, 32>}, {transform_indices = @transform_18, window_bounds = array<i64: 1, 8, 32>}]} {
    %c0_i32 = arith.constant 0 : i32
    %0 = arith.cmpi eq, %arg1, %c0_i32 : i32
    %1 = arith.extui %0 : i1 to i32
    %c0_i32_0 = arith.constant 0 : i32
    %2 = arith.cmpi ne, %1, %c0_i32_0 : i32
    scf.if %2 {
      %c0_34 = arith.constant 0 : index
      %c0_35 = arith.constant 0 : index
      %c0_36 = arith.constant 0 : index
      %51 = vector.load %arg2[%c0_34, %c0_35, %c0_36] : memref<1x8x32xf32, #tpu.memory_space<vmem>>, vector<1x8x32xf32>
      %52 = vector.shape_cast %51 : vector<1x8x32xf32> to vector<8x32xf32>
      %c0_37 = arith.constant 0 : index
      %c0_38 = arith.constant 0 : index
      %53 = vector.load %arg8[%c0_37, %c0_38] : memref<32x32xf32, #tpu.memory_space<vmem>>, vector<32x32xf32>
      %cst_39 = arith.constant dense<0.000000e+00> : vector<8x32xf32>
      %54 = tpu.matmul %52, %53, %cst_39 {dimension_numbers = #tpu.dot_dimension_numbers<[1], [0], [0], [1], [0, 0, 1, 1], [], []>} : vector<8x32xf32>, vector<32x32xf32>, vector<8x32xf32> -> vector<8x32xf32>
      %c0_40 = arith.constant 0 : index
      %c0_41 = arith.constant 0 : index
      %55 = vector.load %arg9[%c0_40, %c0_41] : memref<1x32xf32, #tpu.memory_space<vmem>>, vector<1x32xf32>
      %56 = vector.broadcast %55 : vector<1x32xf32> to vector<8x32xf32>
      %57 = arith.addf %54, %56 : vector<8x32xf32>
      %cst_42 = arith.constant dense<0.000000e+00> : vector<32xf32>
      %58 = vector.multi_reduction <add>, %57, %cst_42 [0] : vector<8x32xf32> to vector<32xf32>
      %59 = vector.shape_cast %58 : vector<32xf32> to vector<1x32xf32>
      %cst_43 = arith.constant 8.000000e+00 : f32
      %60 = vector.broadcast %cst_43 : f32 to vector<1x32xf32>
      %61 = arith.divf %59, %60 : vector<1x32xf32>
      %62 = vector.broadcast %61 : vector<1x32xf32> to vector<8x32xf32>
      %63 = arith.subf %57, %62 : vector<8x32xf32>
      %64 = arith.mulf %63, %63 : vector<8x32xf32>
      %cst_44 = arith.constant dense<0.000000e+00> : vector<32xf32>
      %65 = vector.multi_reduction <add>, %64, %cst_44 [0] : vector<8x32xf32> to vector<32xf32>
      %66 = vector.shape_cast %65 : vector<32xf32> to vector<1x32xf32>
      %cst_45 = arith.constant 8.000000e+00 : f32
      %67 = vector.broadcast %cst_45 : f32 to vector<1x32xf32>
      %68 = arith.divf %66, %67 : vector<1x32xf32>
      %69 = vector.broadcast %61 : vector<1x32xf32> to vector<8x32xf32>
      %70 = arith.subf %57, %69 : vector<8x32xf32>
      %cst_46 = arith.constant 9.99999974E-6 : f32
      %71 = vector.broadcast %cst_46 : f32 to vector<1x32xf32>
      %72 = arith.addf %68, %71 : vector<1x32xf32>
      %73 = math.rsqrt %72 : vector<1x32xf32>
      %74 = vector.broadcast %73 : vector<1x32xf32> to vector<8x32xf32>
      %75 = arith.mulf %70, %74 : vector<8x32xf32>
      %c0_47 = arith.constant 0 : index
      %c0_48 = arith.constant 0 : index
      %c0_49 = arith.constant 0 : index
      %76 = vector.load %arg4[%c0_47, %c0_48, %c0_49] : memref<1x8x1xf32, #tpu.memory_space<vmem>>, vector<1x8x1xf32>
      %77 = vector.shape_cast %76 : vector<1x8x1xf32> to vector<8x1xf32>
      %78 = vector.broadcast %77 : vector<8x1xf32> to vector<8x32xf32>
      %79 = arith.mulf %75, %78 : vector<8x32xf32>
      %cst_50 = arith.constant 0.176776692 : f32
      %80 = vector.broadcast %cst_50 : f32 to vector<8x32xf32>
      %81 = arith.mulf %79, %80 : vector<8x32xf32>
      %c0_51 = arith.constant 0 : index
      %c0_52 = arith.constant 0 : index
      %82 = vector.load %arg21[%c0_51, %c0_52] : memref<8x32xf32, #tpu.memory_space<vmem>>, vector<8x32xf32>
      tpu.vector_store %arg21[%c0_51, %c0_52], %81 {strides = array<i32>} : memref<8x32xf32, #tpu.memory_space<vmem>>, vector<8x32xf32>,
      %cst_53 = arith.constant 0.000000e+00 : f32
      %83 = vector.broadcast %cst_53 : f32 to vector<8x32xf32>
      %c0_54 = arith.constant 0 : index
      %c0_55 = arith.constant 0 : index
      %84 = vector.load %arg22[%c0_54, %c0_55] : memref<8x32xf32, #tpu.memory_space<vmem>>, vector<8x32xf32>
      tpu.vector_store %arg22[%c0_54, %c0_55], %83 {strides = array<i32>} : memref<8x32xf32, #tpu.memory_space<vmem>>, vector<8x32xf32>,
    } else {
    }
    %c0 = arith.constant 0 : index
    %c0_1 = arith.constant 0 : index
    %c0_2 = arith.constant 0 : index
    %3 = vector.load %arg3[%c0, %c0_1, %c0_2] : memref<1x8x64xf32, #tpu.memory_space<vmem>>, vector<1x8x64xf32>
    %4 = vector.shape_cast %3 : vector<1x8x64xf32> to vector<8x64xf32>
    %c0_3 = arith.constant 0 : index
    %c0_4 = arith.constant 0 : index
    %5 = vector.load %arg6[%c0_3, %c0_4] : memref<64x64xf32, #tpu.memory_space<vmem>>, vector<64x64xf32>
    %cst = arith.constant dense<0.000000e+00> : vector<8x64xf32>
    %6 = tpu.matmul %4, %5, %cst {dimension_numbers = #tpu.dot_dimension_numbers<[1], [0], [0], [1], [0, 0, 1, 1], [], []>} : vector<8x64xf32>, vector<64x64xf32>, vector<8x64xf32> -> vector<8x64xf32>
    %c0_5 = arith.constant 0 : index
    %c0_6 = arith.constant 0 : index
    %7 = vector.load %arg7[%c0_5, %c0_6] : memref<1x64xf32, #tpu.memory_space<vmem>>, vector<1x64xf32>
    %8 = vector.broadcast %7 : vector<1x64xf32> to vector<8x64xf32>
    %9 = arith.addf %6, %8 : vector<8x64xf32>
    %cst_7 = arith.constant 5.000000e-01 : f32
    %10 = vector.broadcast %cst_7 : f32 to vector<8x64xf32>
    %11 = arith.mulf %10, %9 : vector<8x64xf32>
    %cst_8 = arith.constant 0.707106769 : f32
    %12 = vector.broadcast %cst_8 : f32 to vector<8x64xf32>
    %13 = arith.mulf %9, %12 : vector<8x64xf32>
    %14 = math.erf %13 : vector<8x64xf32>
    %cst_9 = arith.constant 1.000000e+00 : f32
    %15 = vector.broadcast %cst_9 : f32 to vector<8x64xf32>
    %16 = arith.addf %15, %14 : vector<8x64xf32>
    %17 = arith.mulf %11, %16 : vector<8x64xf32>
    %c0_10 = arith.constant 0 : index
    %c0_11 = arith.constant 0 : index
    %18 = vector.load %arg10[%c0_10, %c0_11] : memref<64x32xf32, #tpu.memory_space<vmem>>, vector<64x32xf32>
    %cst_12 = arith.constant dense<0.000000e+00> : vector<8x32xf32>
    %19 = tpu.matmul %17, %18, %cst_12 {dimension_numbers = #tpu.dot_dimension_numbers<[1], [0], [0], [1], [0, 0, 1, 1], [], []>} : vector<8x64xf32>, vector<64x32xf32>, vector<8x32xf32> -> vector<8x32xf32>
    %c0_13 = arith.constant 0 : index
    %c0_14 = arith.constant 0 : index
    %20 = vector.load %arg11[%c0_13, %c0_14] : memref<1x32xf32, #tpu.memory_space<vmem>>, vector<1x32xf32>
    %21 = vector.broadcast %20 : vector<1x32xf32> to vector<8x32xf32>
    %22 = arith.addf %19, %21 : vector<8x32xf32>
    %c0_15 = arith.constant 0 : index
    %c0_16 = arith.constant 0 : index
    %23 = vector.load %arg12[%c0_15, %c0_16] : memref<64x32xf32, #tpu.memory_space<vmem>>, vector<64x32xf32>
    %cst_17 = arith.constant dense<0.000000e+00> : vector<8x32xf32>
    %24 = tpu.matmul %17, %23, %cst_17 {dimension_numbers = #tpu.dot_dimension_numbers<[1], [0], [0], [1], [0, 0, 1, 1], [], []>} : vector<8x64xf32>, vector<64x32xf32>, vector<8x32xf32> -> vector<8x32xf32>
    %c0_18 = arith.constant 0 : index
    %c0_19 = arith.constant 0 : index
    %25 = vector.load %arg13[%c0_18, %c0_19] : memref<1x32xf32, #tpu.memory_space<vmem>>, vector<1x32xf32>
    %26 = vector.broadcast %25 : vector<1x32xf32> to vector<8x32xf32>
    %27 = arith.addf %24, %26 : vector<8x32xf32>
    %c0_20 = arith.constant 0 : index
    %c0_21 = arith.constant 0 : index
    %28 = vector.load %arg21[%c0_20, %c0_21] : memref<8x32xf32, #tpu.memory_space<vmem>>, vector<8x32xf32>
    %cst_22 = arith.constant dense<0.000000e+00> : vector<8x8xf32>
    %29 = tpu.matmul %22, %28, %cst_22 {dimension_numbers = #tpu.dot_dimension_numbers<[1], [1], [0], [0], [0, 0, 1, 0], [], []>} : vector<8x32xf32>, vector<8x32xf32>, vector<8x8xf32> -> vector<8x8xf32>
    %c0_23 = arith.constant 0 : index
    %c0_24 = arith.constant 0 : index
    %c0_25 = arith.constant 0 : index
    %30 = vector.load %arg5[%c0_23, %c0_24, %c0_25] : memref<1x1x8xf32, #tpu.memory_space<vmem>>, vector<1x1x8xf32>
    %31 = vector.shape_cast %30 : vector<1x1x8xf32> to vector<1x8xf32>
    %32 = vector.broadcast %31 : vector<1x8xf32> to vector<8x8xf32>
    %33 = arith.addf %29, %32 : vector<8x8xf32>
    %cst_26 = arith.constant dense<0xFF800000> : vector<8xf32>
    %34 = vector.multi_reduction <maximumf>, %33, %cst_26 [1] : vector<8x8xf32> to vector<8xf32>
    %35 = vector.shape_cast %34 : vector<8xf32> to vector<8x1xf32>
    %36 = vector.broadcast %35 : vector<8x1xf32> to vector<8x8xf32>
    %37 = arith.subf %33, %36 : vector<8x8xf32>
    %38 = math.exp %37 : vector<8x8xf32>
    %cst_27 = arith.constant dense<0.000000e+00> : vector<8xf32>
    %39 = vector.multi_reduction <add>, %38, %cst_27 [1] : vector<8x8xf32> to vector<8xf32>
    %40 = vector.shape_cast %39 : vector<8xf32> to vector<8x1xf32>
    %41 = tpu.reciprocal %40 : vector<8x1xf32> -> vector<8x1xf32>
    %42 = vector.broadcast %41 : vector<8x1xf32> to vector<8x8xf32>
    %43 = arith.mulf %38, %42 : vector<8x8xf32>
    %c0_28 = arith.constant 0 : index
    %c0_29 = arith.constant 0 : index
    %44 = vector.load %arg22[%c0_28, %c0_29] : memref<8x32xf32, #tpu.memory_space<vmem>>, vector<8x32xf32>
    %cst_30 = arith.constant dense<0.000000e+00> : vector<8x32xf32>
    %45 = tpu.matmul %43, %27, %cst_30 {dimension_numbers = #tpu.dot_dimension_numbers<[0], [0], [1], [1], [0, 1, 1, 1], [], []>} : vector<8x8xf32>, vector<8x32xf32>, vector<8x32xf32> -> vector<8x32xf32>
    %46 = arith.addf %44, %45 : vector<8x32xf32>
    %c0_31 = arith.constant 0 : index
    %c0_32 = arith.constant 0 : index
    %47 = vector.load %arg22[%c0_31, %c0_32] : memref<8x32xf32, #tpu.memory_space<vmem>>, vector<8x32xf32>
    tpu.vector_store %arg22[%c0_31, %c0_32], %46 {strides = array<i32>} : memref<8x32xf32, #tpu.memory_space<vmem>>, vector<8x32xf32>,
    %c1_i32 = arith.constant 1 : i32
    %48 = arith.cmpi eq, %arg1, %c1_i32 : i32
    %49 = arith.extui %48 : i1 to i32
    %c0_i32_33 = arith.constant 0 : i32
    %50 = arith.cmpi ne, %49, %c0_i32_33 : i32
    scf.if %50 {
      %c0_34 = arith.constant 0 : index
      %c0_35 = arith.constant 0 : index
      %c0_36 = arith.constant 0 : index
      %51 = vector.load %arg2[%c0_34, %c0_35, %c0_36] : memref<1x8x32xf32, #tpu.memory_space<vmem>>, vector<1x8x32xf32>
      %52 = vector.shape_cast %51 : vector<1x8x32xf32> to vector<8x32xf32>
      %c0_37 = arith.constant 0 : index
      %c0_38 = arith.constant 0 : index
      %53 = vector.load %arg22[%c0_37, %c0_38] : memref<8x32xf32, #tpu.memory_space<vmem>>, vector<8x32xf32>
      %c0_39 = arith.constant 0 : index
      %c0_40 = arith.constant 0 : index
      %54 = vector.load %arg14[%c0_39, %c0_40] : memref<32x32xf32, #tpu.memory_space<vmem>>, vector<32x32xf32>
      %cst_41 = arith.constant dense<0.000000e+00> : vector<8x32xf32>
      %55 = tpu.matmul %53, %54, %cst_41 {dimension_numbers = #tpu.dot_dimension_numbers<[1], [0], [0], [1], [0, 0, 1, 1], [], []>} : vector<8x32xf32>, vector<32x32xf32>, vector<8x32xf32> -> vector<8x32xf32>
      %c0_42 = arith.constant 0 : index
      %c0_43 = arith.constant 0 : index
      %56 = vector.load %arg15[%c0_42, %c0_43] : memref<1x32xf32, #tpu.memory_space<vmem>>, vector<1x32xf32>
      %57 = vector.broadcast %56 : vector<1x32xf32> to vector<8x32xf32>
      %58 = arith.addf %55, %57 : vector<8x32xf32>
      %cst_44 = arith.constant dense<0.000000e+00> : vector<32xf32>
      %59 = vector.multi_reduction <add>, %58, %cst_44 [0] : vector<8x32xf32> to vector<32xf32>
      %60 = vector.shape_cast %59 : vector<32xf32> to vector<1x32xf32>
      %cst_45 = arith.constant 8.000000e+00 : f32
      %61 = vector.broadcast %cst_45 : f32 to vector<1x32xf32>
      %62 = arith.divf %60, %61 : vector<1x32xf32>
      %63 = vector.broadcast %62 : vector<1x32xf32> to vector<8x32xf32>
      %64 = arith.subf %58, %63 : vector<8x32xf32>
      %65 = arith.mulf %64, %64 : vector<8x32xf32>
      %cst_46 = arith.constant dense<0.000000e+00> : vector<32xf32>
      %66 = vector.multi_reduction <add>, %65, %cst_46 [0] : vector<8x32xf32> to vector<32xf32>
      %67 = vector.shape_cast %66 : vector<32xf32> to vector<1x32xf32>
      %cst_47 = arith.constant 8.000000e+00 : f32
      %68 = vector.broadcast %cst_47 : f32 to vector<1x32xf32>
      %69 = arith.divf %67, %68 : vector<1x32xf32>
      %70 = vector.broadcast %62 : vector<1x32xf32> to vector<8x32xf32>
      %71 = arith.subf %58, %70 : vector<8x32xf32>
      %cst_48 = arith.constant 9.99999974E-6 : f32
      %72 = vector.broadcast %cst_48 : f32 to vector<1x32xf32>
      %73 = arith.addf %69, %72 : vector<1x32xf32>
      %74 = math.rsqrt %73 : vector<1x32xf32>
      %75 = vector.broadcast %74 : vector<1x32xf32> to vector<8x32xf32>
      %76 = arith.mulf %71, %75 : vector<8x32xf32>
      %77 = arith.mulf %52, %76 : vector<8x32xf32>
      %c0_49 = arith.constant 0 : index
      %c0_50 = arith.constant 0 : index
      %78 = vector.load %arg16[%c0_49, %c0_50] : memref<32x32xf32, #tpu.memory_space<vmem>>, vector<32x32xf32>
      %cst_51 = arith.constant dense<0.000000e+00> : vector<8x32xf32>
      %79 = tpu.matmul %77, %78, %cst_51 {dimension_numbers = #tpu.dot_dimension_numbers<[1], [0], [0], [1], [0, 0, 1, 1], [], []>} : vector<8x32xf32>, vector<32x32xf32>, vector<8x32xf32> -> vector<8x32xf32>
      %c0_52 = arith.constant 0 : index
      %c0_53 = arith.constant 0 : index
      %80 = vector.load %arg17[%c0_52, %c0_53] : memref<1x32xf32, #tpu.memory_space<vmem>>, vector<1x32xf32>
      %81 = vector.broadcast %80 : vector<1x32xf32> to vector<8x32xf32>
      %82 = arith.addf %79, %81 : vector<8x32xf32>
      %cst_54 = arith.constant 5.000000e-01 : f32
      %83 = vector.broadcast %cst_54 : f32 to vector<8x32xf32>
      %84 = arith.mulf %83, %82 : vector<8x32xf32>
      %cst_55 = arith.constant 0.707106769 : f32
      %85 = vector.broadcast %cst_55 : f32 to vector<8x32xf32>
      %86 = arith.mulf %82, %85 : vector<8x32xf32>
      %87 = math.erf %86 : vector<8x32xf32>
      %cst_56 = arith.constant 1.000000e+00 : f32
      %88 = vector.broadcast %cst_56 : f32 to vector<8x32xf32>
      %89 = arith.addf %88, %87 : vector<8x32xf32>
      %90 = arith.mulf %84, %89 : vector<8x32xf32>
      %cst_57 = arith.constant dense<0.000000e+00> : vector<8xf32>
      %91 = vector.multi_reduction <add>, %90, %cst_57 [1] : vector<8x32xf32> to vector<8xf32>
      %92 = vector.shape_cast %91 : vector<8xf32> to vector<8x1xf32>
      %cst_58 = arith.constant 3.200000e+01 : f32
      %93 = vector.broadcast %cst_58 : f32 to vector<8x1xf32>
      %94 = arith.divf %92, %93 : vector<8x1xf32>
      %95 = vector.broadcast %94 : vector<8x1xf32> to vector<8x32xf32>
      %96 = arith.subf %90, %95 : vector<8x32xf32>
      %97 = arith.mulf %96, %96 : vector<8x32xf32>
      %cst_59 = arith.constant dense<0.000000e+00> : vector<8xf32>
      %98 = vector.multi_reduction <add>, %97, %cst_59 [1] : vector<8x32xf32> to vector<8xf32>
      %99 = vector.shape_cast %98 : vector<8xf32> to vector<8x1xf32>
      %cst_60 = arith.constant 3.200000e+01 : f32
      %100 = vector.broadcast %cst_60 : f32 to vector<8x1xf32>
      %101 = arith.divf %99, %100 : vector<8x1xf32>
      %102 = vector.broadcast %94 : vector<8x1xf32> to vector<8x32xf32>
      %103 = arith.subf %90, %102 : vector<8x32xf32>
      %cst_61 = arith.constant 9.99999974E-6 : f32
      %104 = vector.broadcast %cst_61 : f32 to vector<8x1xf32>
      %105 = arith.addf %101, %104 : vector<8x1xf32>
      %106 = math.rsqrt %105 : vector<8x1xf32>
      %107 = vector.broadcast %106 : vector<8x1xf32> to vector<8x32xf32>
      %108 = arith.mulf %103, %107 : vector<8x32xf32>
      %c0_62 = arith.constant 0 : index
      %c0_63 = arith.constant 0 : index
      %109 = vector.load %arg18[%c0_62, %c0_63] : memref<1x32xf32, #tpu.memory_space<vmem>>, vector<1x32xf32>
      %110 = vector.broadcast %109 : vector<1x32xf32> to vector<8x32xf32>
      %111 = arith.mulf %108, %110 : vector<8x32xf32>
      %c0_64 = arith.constant 0 : index
      %c0_65 = arith.constant 0 : index
      %112 = vector.load %arg19[%c0_64, %c0_65] : memref<1x32xf32, #tpu.memory_space<vmem>>, vector<1x32xf32>
      %113 = vector.broadcast %112 : vector<1x32xf32> to vector<8x32xf32>
      %114 = arith.addf %111, %113 : vector<8x32xf32>
      %c0_66 = arith.constant 0 : index
      %c0_67 = arith.constant 0 : index
      %c0_68 = arith.constant 0 : index
      %115 = vector.load %arg20[%c0_66, %c0_67, %c0_68] : memref<1x8x32xf32, #tpu.memory_space<vmem>>, vector<1x8x32xf32>
      %116 = vector.shape_cast %115 : vector<1x8x32xf32> to vector<8x32xf32>
      %117 = vector.shape_cast %114 : vector<8x32xf32> to vector<1x8x32xf32>
      tpu.vector_store %arg20[%c0_66, %c0_67, %c0_68], %117 {strides = array<i32>} : memref<1x8x32xf32, #tpu.memory_space<vmem>>, vector<1x8x32xf32>,
    } else {
    }
    return
  }
  func.func @transform_0(%arg0: i32, %arg1: i32) -> (i32, i32, i32) {
    %c0_i32 = arith.constant 0 : i32
    %c0_i32_0 = arith.constant 0 : i32
    %c0_i32_1 = arith.constant 0 : i32
    return %arg0, %c0_i32, %c0_i32_0 : i32, i32, i32
  }
  func.func @transform_1(%arg0: i32, %arg1: i32) -> (i32, i32, i32) {
    %c0_i32 = arith.constant 0 : i32
    %c0_i32_0 = arith.constant 0 : i32
    return %arg0, %arg1, %c0_i32 : i32, i32, i32
  }
  func.func @transform_2(%arg0: i32, %arg1: i32) -> (i32, i32, i32) {
    %c0_i32 = arith.constant 0 : i32
    %c0_i32_0 = arith.constant 0 : i32
    %c0_i32_1 = arith.constant 0 : i32
    return %arg0, %c0_i32, %c0_i32_0 : i32, i32, i32
  }
  func.func @transform_3(%arg0: i32, %arg1: i32) -> (i32, i32, i32) {
    %c0_i32 = arith.constant 0 : i32
    %c0_i32_0 = arith.constant 0 : i32
    %c0_i32_1 = arith.constant 0 : i32
    return %arg0, %c0_i32, %c0_i32_0 : i32, i32, i32
  }
  func.func @transform_4(%arg0: i32, %arg1: i32) -> (i32, i32) {
    %c0_i32 = arith.constant 0 : i32
    %c0_i32_0 = arith.constant 0 : i32
    %c0_i32_1 = arith.constant 0 : i32
    return %c0_i32, %c0_i32_0 : i32, i32
  }
  func.func @transform_5(%arg0: i32, %arg1: i32) -> (i32, i32) {
    %c0_i32 = arith.constant 0 : i32
    %c0_i32_0 = arith.constant 0 : i32
    %c0_i32_1 = arith.constant 0 : i32
    return %c0_i32, %c0_i32_0 : i32, i32
  }
  func.func @transform_6(%arg0: i32, %arg1: i32) -> (i32, i32) {
    %c0_i32 = arith.constant 0 : i32
    %c0_i32_0 = arith.constant 0 : i32
    %c0_i32_1 = arith.constant 0 : i32
    return %c0_i32, %c0_i32_0 : i32, i32
  }
  func.func @transform_7(%arg0: i32, %arg1: i32) -> (i32, i32) {
    %c0_i32 = arith.constant 0 : i32
    %c0_i32_0 = arith.constant 0 : i32
    %c0_i32_1 = arith.constant 0 : i32
    return %c0_i32, %c0_i32_0 : i32, i32
  }
  func.func @transform_8(%arg0: i32, %arg1: i32) -> (i32, i32) {
    %c0_i32 = arith.constant 0 : i32
    %c0_i32_0 = arith.constant 0 : i32
    %c0_i32_1 = arith.constant 0 : i32
    return %c0_i32, %c0_i32_0 : i32, i32
  }
  func.func @transform_9(%arg0: i32, %arg1: i32) -> (i32, i32) {
    %c0_i32 = arith.constant 0 : i32
    %c0_i32_0 = arith.constant 0 : i32
    %c0_i32_1 = arith.constant 0 : i32
    return %c0_i32, %c0_i32_0 : i32, i32
  }
  func.func @transform_10(%arg0: i32, %arg1: i32) -> (i32, i32) {
    %c0_i32 = arith.constant 0 : i32
    %c0_i32_0 = arith.constant 0 : i32
    %c0_i32_1 = arith.constant 0 : i32
    return %c0_i32, %c0_i32_0 : i32, i32
  }
  func.func @transform_11(%arg0: i32, %arg1: i32) -> (i32, i32) {
    %c0_i32 = arith.constant 0 : i32
    %c0_i32_0 = arith.constant 0 : i32
    %c0_i32_1 = arith.constant 0 : i32
    return %c0_i32, %c0_i32_0 : i32, i32
  }
  func.func @transform_12(%arg0: i32, %arg1: i32) -> (i32, i32) {
    %c0_i32 = arith.constant 0 : i32
    %c0_i32_0 = arith.constant 0 : i32
    %c0_i32_1 = arith.constant 0 : i32
    return %c0_i32, %c0_i32_0 : i32, i32
  }
  func.func @transform_13(%arg0: i32, %arg1: i32) -> (i32, i32) {
    %c0_i32 = arith.constant 0 : i32
    %c0_i32_0 = arith.constant 0 : i32
    %c0_i32_1 = arith.constant 0 : i32
    return %c0_i32, %c0_i32_0 : i32, i32
  }
  func.func @transform_14(%arg0: i32, %arg1: i32) -> (i32, i32) {
    %c0_i32 = arith.constant 0 : i32
    %c0_i32_0 = arith.constant 0 : i32
    %c0_i32_1 = arith.constant 0 : i32
    return %c0_i32, %c0_i32_0 : i32, i32
  }
  func.func @transform_15(%arg0: i32, %arg1: i32) -> (i32, i32) {
    %c0_i32 = arith.constant 0 : i32
    %c0_i32_0 = arith.constant 0 : i32
    %c0_i32_1 = arith.constant 0 : i32
    return %c0_i32, %c0_i32_0 : i32, i32
  }
  func.func @transform_16(%arg0: i32, %arg1: i32) -> (i32, i32) {
    %c0_i32 = arith.constant 0 : i32
    %c0_i32_0 = arith.constant 0 : i32
    %c0_i32_1 = arith.constant 0 : i32
    return %c0_i32, %c0_i32_0 : i32, i32
  }
  func.func @transform_17(%arg0: i32, %arg1: i32) -> (i32, i32) {
    %c0_i32 = arith.constant 0 : i32
    %c0_i32_0 = arith.constant 0 : i32
    %c0_i32_1 = arith.constant 0 : i32
    return %c0_i32, %c0_i32_0 : i32, i32
  }
  func.func @transform_18(%arg0: i32, %arg1: i32) -> (i32, i32, i32) {
    %c0_i32 = arith.constant 0 : i32
    %c0_i32_0 = arith.constant 0 : i32
    %c0_i32_1 = arith.constant 0 : i32
    return %arg0, %c0_i32, %c0_i32_0 : i32, i32, i32
  }
}

</mosaic_0001>

<llo_original>
// kernel: text_residual_attention_block.1
$region0: #{text_residual_attention_block.1}
  #allocation0 [shape = 'u32[]', space=smem, size = 0x4, offset = 0x4, fixed_abs, tag = 'smem constant byte address 0x4 - core index']
  #allocation1 [shape = 'u32[144,128]{1,0:T(1,128)}', space=vmem, size = 0x12000, scoped, tag = 'internal scratch']
  #allocation2 [shape = 'f32[8,32]{1,0:T(8,128)}', space=vmem, size = 0x1000, scoped, tag = 'scratch operand']
  #allocation3 [shape = 'f32[8,32]{1,0:T(8,128)}', space=vmem, size = 0x1000, scoped, tag = 'scratch operand']
  %s0 = inlined_call_operand.vmem [shape: f32[2,8,32], index: 0, kind: input, shape index: {}]
  %s1 = inlined_call_operand.vmem [shape: f32[2,16,64], index: 1, kind: input, shape index: {}]
  %s2 = inlined_call_operand.vmem [shape: f32[2,8,1], index: 2, kind: input, shape index: {}]
  %s3 = inlined_call_operand.vmem [shape: f32[2,1,8], index: 3, kind: input, shape index: {}]
  %s4 = inlined_call_operand.vmem [shape: f32[64,64], index: 4, kind: input, shape index: {}]
  %s5 = inlined_call_operand.vmem [shape: f32[1,64], index: 5, kind: input, shape index: {}]
  %s6 = inlined_call_operand.vmem [shape: f32[32,32], index: 6, kind: input, shape index: {}]
  %s7 = inlined_call_operand.vmem [shape: f32[1,32], index: 7, kind: input, shape index: {}]
  %s8 = inlined_call_operand.vmem [shape: f32[64,32], index: 8, kind: input, shape index: {}]
  %s9 = inlined_call_operand.vmem [shape: f32[1,32], index: 9, kind: input, shape index: {}]
  %s10 = inlined_call_operand.vmem [shape: f32[64,32], index: 10, kind: input, shape index: {}]
  %s11 = inlined_call_operand.vmem [shape: f32[1,32], index: 11, kind: input, shape index: {}]
  %s12 = inlined_call_operand.vmem [shape: f32[32,32], index: 12, kind: input, shape index: {}]
  %s13 = inlined_call_operand.hbm [shape: f32[1,32], index: 13, kind: input, shape index: {}]
  %s14 = inlined_call_operand.vmem [shape: f32[32,32], index: 14, kind: input, shape index: {}]
  %s15 = inlined_call_operand.vmem [shape: f32[1,32], index: 15, kind: input, shape index: {}]
  %s16 = inlined_call_operand.vmem [shape: f32[1,32], index: 16, kind: input, shape index: {}]
  %s17 = inlined_call_operand.vmem [shape: f32[1,32], index: 17, kind: input, shape index: {}]
  %s18 = inlined_call_operand.vmem [shape: f32[2,8,32], index: 18, kind: output, shape index: {}]
  %s19 = sld [smem:[#allocation0]]
  $region117: #{text_residual_attention_block.1} parent=0
    _
  %s21 = ssub.s32 1, %s19
  %s22 = scalar_select 0, %s21, %s19
  $region1: #{text_residual_attention_block.1} parent=0
    #allocation4 [shape = 'u8[512]{0}', space=vmem, size = 0x400, scoped, tag = 'input window, operand 13, single buffered']
    #allocation5 [shape = 's32[2]{0}', space=sflag, size = 0x8, scoped, tag = 'scoped memory for text_residual_attention_block.1']
    %23 = vsyncpa [#allocation5], 0
    loop: start=0, step=1, limit=6
    $region2: #{text_residual_attention_block.1} parent=1 // loop_pre_header
      _
    $region3: #{text_residual_attention_block.1} parent=1 // loop_header
      %s25 = sphi 0, %s29
      %p26 = scmp.ge.s32.totalorder %s25, 6
      %s32 = sphi 0, %s44
      %s33 = sphi 0, %s40
      %s34 = sphi 0, %s32
      %s35 = sphi 0, %s33
      %s36 = sphi 0, %s34
      %s37 = sphi 0, %s35
      %s47 = sphi 0, %s49
      %s50 = sphi 0, %s47
      %s51 = sphi 0, %s50
      %s67 = sphi 0, %s51
      %s75 = sphi 0, %s77
      %s78 = sphi 0, %s75
      %s79 = sphi 0, %s78
      %s95 = sphi 0, %s79
      %s101 = sphi 0, %s103
      %s104 = sphi 0, %s101
      %s105 = sphi 0, %s104
      %s121 = sphi 0, %s105
      %s127 = sphi 0, %s129
      %s130 = sphi 0, %s127
      %s131 = sphi 0, %s130
      %s147 = sphi 0, %s131
      %s151 = sphi 0, %s151
      %s153 = sphi 0, %s151
      %s154 = sphi 0, %s153
      %s168 = sphi 0, %s154
      %s172 = sphi 0, %s172
      %s174 = sphi 0, %s172
      %s175 = sphi 0, %s174
      %s189 = sphi 0, %s175
      %s193 = sphi 0, %s193
      %s195 = sphi 0, %s193
      %s196 = sphi 0, %s195
      %s210 = sphi 0, %s196
      %s214 = sphi 0, %s214
      %s216 = sphi 0, %s214
      %s217 = sphi 0, %s216
      %s231 = sphi 0, %s217
      %s235 = sphi 0, %s235
      %s237 = sphi 0, %s235
      %s238 = sphi 0, %s237
      %s252 = sphi 0, %s238
      %s256 = sphi 0, %s256
      %s258 = sphi 0, %s256
      %s259 = sphi 0, %s258
      %s273 = sphi 0, %s259
      %s277 = sphi 0, %s277
      %s279 = sphi 0, %s277
      %s280 = sphi 0, %s279
      %s294 = sphi 0, %s280
      %s298 = sphi 0, %s298
      %s300 = sphi 0, %s298
      %s301 = sphi 0, %s300
      %s315 = sphi 0, %s301
      %s319 = sphi 0, %s319
      %s321 = sphi 0, %s319
      %s322 = sphi 0, %s321
      %s336 = sphi 0, %s322
      %s340 = sphi 0, %s340
      %s342 = sphi 0, %s340
      %s343 = sphi 0, %s342
      %s357 = sphi 0, %s343
      %s361 = sphi 0, %s361
      %s363 = sphi 0, %s361
      %s364 = sphi 0, %s363
      %s378 = sphi 0, %s364
      %s382 = sphi 0, %s382
      %s384 = sphi 0, %s382
      %s385 = sphi 0, %s384
      %s399 = sphi 0, %s385
      %s403 = sphi 0, %s403
      %s405 = sphi 0, %s403
      %s406 = sphi 0, %s405
      %s420 = sphi 0, %s406
      %s424 = sphi 0, %s424
      %s426 = sphi 0, %s424
      %s427 = sphi 0, %s426
      %s441 = sphi 0, %s427
      %s447 = sphi 0, %s449
      %s450 = sphi 0, %s447
      %s451 = sphi 0, %s450
      %s467 = sphi 0, %s451
    $region4: #{text_residual_attention_block.1} parent=1 // loop_header_branch
      %28 = sbr.rel (%p26) target = $region8
    $region5: #{text_residual_attention_block.1} parent=1 // loop_body
      %s30 = ssub.s32 %s25, 1
      %s31 = ssub.s32 %s25, 2
      %s38 = sadd.s32 1, %s33
      %p39 = scmp.ge.s32.totalorder %s38, 2
      %s40 = scalar_select %p39, 0, %s38
      %s41 = sadd.s32 1, %s32
      %s42 = scalar_select %p39, %s41, %s32
      %p43 = scmp.ge.s32.totalorder %s42, 2
      %s44 = scalar_select %p43, 0, %s42
      %s45 = ssub.s32 %s32, %s44
      %p46 = scmp.eq.s32.totalorder %s45, 0
      %s48 = sadd.s32 %s47, 1
      %s49 = scalar_select %p46, %s47, %s48
      %p52 = pneg %p46
      %p53 = scmp.eq.s32.totalorder %s25, 3
      %p54 = por %p52, %p53
      %p55 = scmp.ne.s32.totalorder %s47, %s50
      %p56 = scmp.eq.s32.totalorder %s25, 0
      %p57 = por %p55, %p56
      %p58 = scmp.ne.s32.totalorder %s47, %s50
      %p59 = scmp.eq.s32.totalorder %s30, 3
      %p60 = por %p58, %p59
      %p61 = scmp.ne.s32.totalorder %s50, %s51
      %p62 = scmp.eq.s32.totalorder %s30, 0
      %p63 = por %p61, %p62
      %p64 = scmp.ne.s32.totalorder %s50, %s51
      %p65 = scmp.eq.s32.totalorder %s31, 3
      %p66 = por %p64, %p65
      %p68 = scmp.ne.s32.totalorder %s51, %s67
      %p69 = scmp.eq.s32.totalorder %s31, 0
      %p70 = por %p68, %p69
      %s71 = ssub.s32 %s32, %s44
      %s72 = ssub.s32 %s33, %s40
      %s73 = sor.u32 %s71, %s72
      %p74 = scmp.eq.s32.totalorder %s73, 0
      %s76 = sadd.s32 %s75, 1
      %s77 = scalar_select %p74, %s75, %s76
      %p80 = pneg %p74
      %p81 = scmp.eq.s32.totalorder %s25, 3
      %p82 = por %p80, %p81
      %p83 = scmp.ne.s32.totalorder %s75, %s78
      %p84 = scmp.eq.s32.totalorder %s25, 0
      %p85 = por %p83, %p84
      %p86 = scmp.ne.s32.totalorder %s75, %s78
      %p87 = scmp.eq.s32.totalorder %s30, 3
      %p88 = por %p86, %p87
      %p89 = scmp.ne.s32.totalorder %s78, %s79
      %p90 = scmp.eq.s32.totalorder %s30, 0
      %p91 = por %p89, %p90
      %p92 = scmp.ne.s32.totalorder %s78, %s79
      %p93 = scmp.eq.s32.totalorder %s31, 3
      %p94 = por %p92, %p93
      %p96 = scmp.ne.s32.totalorder %s79, %s95
      %p97 = scmp.eq.s32.totalorder %s31, 0
      %p98 = por %p96, %p97
      %s99 = ssub.s32 %s32, %s44
      %p100 = scmp.eq.s32.totalorder %s99, 0
      %s102 = sadd.s32 %s101, 1
      %s103 = scalar_select %p100, %s101, %s102
      %p106 = pneg %p100
      %p107 = scmp.eq.s32.totalorder %s25, 3
      %p108 = por %p106, %p107
      %p109 = scmp.ne.s32.totalorder %s101, %s104
      %p110 = scmp.eq.s32.totalorder %s25, 0
      %p111 = por %p109, %p110
      %p112 = scmp.ne.s32.totalorder %s101, %s104
      %p113 = scmp.eq.s32.totalorder %s30, 3
      %p114 = por %p112, %p113
      %p115 = scmp.ne.s32.totalorder %s104, %s105
      %p116 = scmp.eq.s32.totalorder %s30, 0
      %p117 = por %p115, %p116
      %p118 = scmp.ne.s32.totalorder %s104, %s105
      %p119 = scmp.eq.s32.totalorder %s31, 3
      %p120 = por %p118, %p119
      %p122 = scmp.ne.s32.totalorder %s105, %s121
      %p123 = scmp.eq.s32.totalorder %s31, 0
      %p124 = por %p122, %p123
      %s125 = ssub.s32 %s32, %s44
      %p126 = scmp.eq.s32.totalorder %s125, 0
      %s128 = sadd.s32 %s127, 1
      %s129 = scalar_select %p126, %s127, %s128
      %p132 = pneg %p126
      %p133 = scmp.eq.s32.totalorder %s25, 3
      %p134 = por %p132, %p133
      %p135 = scmp.ne.s32.totalorder %s127, %s130
      %p136 = scmp.eq.s32.totalorder %s25, 0
      %p137 = por %p135, %p136
      %p138 = scmp.ne.s32.totalorder %s127, %s130
      %p139 = scmp.eq.s32.totalorder %s30, 3
      %p140 = por %p138, %p139
      %p141 = scmp.ne.s32.totalorder %s130, %s131
      %p142 = scmp.eq.s32.totalorder %s30, 0
      %p143 = por %p141, %p142
      %p144 = scmp.ne.s32.totalorder %s130, %s131
      %p145 = scmp.eq.s32.totalorder %s31, 3
      %p146 = por %p144, %p145
      %p148 = scmp.ne.s32.totalorder %s131, %s147
      %p149 = scmp.eq.s32.totalorder %s31, 0
      %p150 = por %p148, %p149
      %s152 = sadd.s32 %s151, 1
      %p155 = scmp.eq.s32.totalorder %s25, 3
      %p156 = scmp.ne.s32.totalorder %s151, %s153
      %p157 = scmp.eq.s32.totalorder %s25, 0
      %p158 = por %p156, %p157
      %p159 = scmp.ne.s32.totalorder %s151, %s153
      %p160 = scmp.eq.s32.totalorder %s30, 3
      %p161 = por %p159, %p160
      %p162 = scmp.ne.s32.totalorder %s153, %s154
      %p163 = scmp.eq.s32.totalorder %s30, 0
      %p164 = por %p162, %p163
      %p165 = scmp.ne.s32.totalorder %s153, %s154
      %p166 = scmp.eq.s32.totalorder %s31, 3
      %p167 = por %p165, %p166
      %p169 = scmp.ne.s32.totalorder %s154, %s168
      %p170 = scmp.eq.s32.totalorder %s31, 0
      %p171 = por %p169, %p170
      %s173 = sadd.s32 %s172, 1
      %p176 = scmp.eq.s32.totalorder %s25, 3
      %p177 = scmp.ne.s32.totalorder %s172, %s174
      %p178 = scmp.eq.s32.totalorder %s25, 0
      %p179 = por %p177, %p178
      %p180 = scmp.ne.s32.totalorder %s172, %s174
      %p181 = scmp.eq.s32.totalorder %s30, 3
      %p182 = por %p180, %p181
      %p183 = scmp.ne.s32.totalorder %s174, %s175
      %p184 = scmp.eq.s32.totalorder %s30, 0
      %p185 = por %p183, %p184
      %p186 = scmp.ne.s32.totalorder %s174, %s175
      %p187 = scmp.eq.s32.totalorder %s31, 3
      %p188 = por %p186, %p187
      %p190 = scmp.ne.s32.totalorder %s175, %s189
      %p191 = scmp.eq.s32.totalorder %s31, 0
      %p192 = por %p190, %p191
      %s194 = sadd.s32 %s193, 1
      %p197 = scmp.eq.s32.totalorder %s25, 3
      %p198 = scmp.ne.s32.totalorder %s193, %s195
      %p199 = scmp.eq.s32.totalorder %s25, 0
      %p200 = por %p198, %p199
      %p201 = scmp.ne.s32.totalorder %s193, %s195
      %p202 = scmp.eq.s32.totalorder %s30, 3
      %p203 = por %p201, %p202
      %p204 = scmp.ne.s32.totalorder %s195, %s196
      %p205 = scmp.eq.s32.totalorder %s30, 0
      %p206 = por %p204, %p205
      %p207 = scmp.ne.s32.totalorder %s195, %s196
      %p208 = scmp.eq.s32.totalorder %s31, 3
      %p209 = por %p207, %p208
      %p211 = scmp.ne.s32.totalorder %s196, %s210
      %p212 = scmp.eq.s32.totalorder %s31, 0
      %p213 = por %p211, %p212
      %s215 = sadd.s32 %s214, 1
      %p218 = scmp.eq.s32.totalorder %s25, 3
      %p219 = scmp.ne.s32.totalorder %s214, %s216
      %p220 = scmp.eq.s32.totalorder %s25, 0
      %p221 = por %p219, %p220
      %p222 = scmp.ne.s32.totalorder %s214, %s216
      %p223 = scmp.eq.s32.totalorder %s30, 3
      %p224 = por %p222, %p223
      %p225 = scmp.ne.s32.totalorder %s216, %s217
      %p226 = scmp.eq.s32.totalorder %s30, 0
      %p227 = por %p225, %p226
      %p228 = scmp.ne.s32.totalorder %s216, %s217
      %p229 = scmp.eq.s32.totalorder %s31, 3
      %p230 = por %p228, %p229
      %p232 = scmp.ne.s32.totalorder %s217, %s231
      %p233 = scmp.eq.s32.totalorder %s31, 0
      %p234 = por %p232, %p233
      %s236 = sadd.s32 %s235, 1
      %p239 = scmp.eq.s32.totalorder %s25, 3
      %p240 = scmp.ne.s32.totalorder %s235, %s237
      %p241 = scmp.eq.s32.totalorder %s25, 0
      %p242 = por %p240, %p241
      %p243 = scmp.ne.s32.totalorder %s235, %s237
      %p244 = scmp.eq.s32.totalorder %s30, 3
      %p245 = por %p243, %p244
      %p246 = scmp.ne.s32.totalorder %s237, %s238
      %p247 = scmp.eq.s32.totalorder %s30, 0
      %p248 = por %p246, %p247
      %p249 = scmp.ne.s32.totalorder %s237, %s238
      %p250 = scmp.eq.s32.totalorder %s31, 3
      %p251 = por %p249, %p250
      %p253 = scmp.ne.s32.totalorder %s238, %s252
      %p254 = scmp.eq.s32.totalorder %s31, 0
      %p255 = por %p253, %p254
      %s257 = sadd.s32 %s256, 1
      %p260 = scmp.eq.s32.totalorder %s25, 3
      %p261 = scmp.ne.s32.totalorder %s256, %s258
      %p262 = scmp.eq.s32.totalorder %s25, 0
      %p263 = por %p261, %p262
      %p264 = scmp.ne.s32.totalorder %s256, %s258
      %p265 = scmp.eq.s32.totalorder %s30, 3
      %p266 = por %p264, %p265
      %p267 = scmp.ne.s32.totalorder %s258, %s259
      %p268 = scmp.eq.s32.totalorder %s30, 0
      %p269 = por %p267, %p268
      %p270 = scmp.ne.s32.totalorder %s258, %s259
      %p271 = scmp.eq.s32.totalorder %s31, 3
      %p272 = por %p270, %p271
      %p274 = scmp.ne.s32.totalorder %s259, %s273
      %p275 = scmp.eq.s32.totalorder %s31, 0
      %p276 = por %p274, %p275
      %s278 = sadd.s32 %s277, 1
      %p281 = scmp.eq.s32.totalorder %s25, 3
      %p282 = scmp.ne.s32.totalorder %s277, %s279
      %p283 = scmp.eq.s32.totalorder %s25, 0
      %p284 = por %p282, %p283
      %p285 = scmp.ne.s32.totalorder %s277, %s279
      %p286 = scmp.eq.s32.totalorder %s30, 3
      %p287 = por %p285, %p286
      %p288 = scmp.ne.s32.totalorder %s279, %s280
      %p289 = scmp.eq.s32.totalorder %s30, 0
      %p290 = por %p288, %p289
      %p291 = scmp.ne.s32.totalorder %s279, %s280
      %p292 = scmp.eq.s32.totalorder %s31, 3
      %p293 = por %p291, %p292
      %p295 = scmp.ne.s32.totalorder %s280, %s294
      %p296 = scmp.eq.s32.totalorder %s31, 0
      %p297 = por %p295, %p296
      %s299 = sadd.s32 %s298, 1
      %p302 = scmp.eq.s32.totalorder %s25, 3
      %p303 = scmp.ne.s32.totalorder %s298, %s300
      %p304 = scmp.eq.s32.totalorder %s25, 0
      %p305 = por %p303, %p304
      %p306 = scmp.ne.s32.totalorder %s298, %s300
      %p307 = scmp.eq.s32.totalorder %s30, 3
      %p308 = por %p306, %p307
      %p309 = scmp.ne.s32.totalorder %s300, %s301
      %p310 = scmp.eq.s32.totalorder %s30, 0
      %p311 = por %p309, %p310
      %p312 = scmp.ne.s32.totalorder %s300, %s301
      %p313 = scmp.eq.s32.totalorder %s31, 3
      %p314 = por %p312, %p313
      %p316 = scmp.ne.s32.totalorder %s301, %s315
      %p317 = scmp.eq.s32.totalorder %s31, 0
      %p318 = por %p316, %p317
      %s320 = sadd.s32 %s319, 1
      %p323 = scmp.eq.s32.totalorder %s25, 3
      %p324 = scmp.ne.s32.totalorder %s319, %s321
      %p325 = scmp.eq.s32.totalorder %s25, 0
      %p326 = por %p324, %p325
      %p327 = scmp.ne.s32.totalorder %s319, %s321
      %p328 = scmp.eq.s32.totalorder %s30, 3
      %p329 = por %p327, %p328
      %p330 = scmp.ne.s32.totalorder %s321, %s322
      %p331 = scmp.eq.s32.totalorder %s30, 0
      %p332 = por %p330, %p331
      %p333 = scmp.ne.s32.totalorder %s321, %s322
      %p334 = scmp.eq.s32.totalorder %s31, 3
      %p335 = por %p333, %p334
      %p337 = scmp.ne.s32.totalorder %s322, %s336
      %p338 = scmp.eq.s32.totalorder %s31, 0
      %p339 = por %p337, %p338
      %s341 = sadd.s32 %s340, 1
      %p344 = scmp.eq.s32.totalorder %s25, 3
      %p345 = scmp.ne.s32.totalorder %s340, %s342
      %p346 = scmp.eq.s32.totalorder %s25, 0
      %p347 = por %p345, %p346
      %p348 = scmp.ne.s32.totalorder %s340, %s342
      %p349 = scmp.eq.s32.totalorder %s30, 3
      %p350 = por %p348, %p349
      %p351 = scmp.ne.s32.totalorder %s342, %s343
      %p352 = scmp.eq.s32.totalorder %s30, 0
      %p353 = por %p351, %p352
      %p354 = scmp.ne.s32.totalorder %s342, %s343
      %p355 = scmp.eq.s32.totalorder %s31, 3
      %p356 = por %p354, %p355
      %p358 = scmp.ne.s32.totalorder %s343, %s357
      %p359 = scmp.eq.s32.totalorder %s31, 0
      %p360 = por %p358, %p359
      %s362 = sadd.s32 %s361, 1
      %p365 = scmp.eq.s32.totalorder %s25, 3
      %p366 = scmp.ne.s32.totalorder %s361, %s363
      %p367 = scmp.eq.s32.totalorder %s25, 0
      %p368 = por %p366, %p367
      %p369 = scmp.ne.s32.totalorder %s361, %s363
      %p370 = scmp.eq.s32.totalorder %s30, 3
      %p371 = por %p369, %p370
      %p372 = scmp.ne.s32.totalorder %s363, %s364
      %p373 = scmp.eq.s32.totalorder %s30, 0
      %p374 = por %p372, %p373
      %p375 = scmp.ne.s32.totalorder %s363, %s364
      %p376 = scmp.eq.s32.totalorder %s31, 3
      %p377 = por %p375, %p376
      %p379 = scmp.ne.s32.totalorder %s364, %s378
      %p380 = scmp.eq.s32.totalorder %s31, 0
      %p381 = por %p379, %p380
      %s383 = sadd.s32 %s382, 1
      %p386 = scmp.eq.s32.totalorder %s25, 3
      %p387 = scmp.ne.s32.totalorder %s382, %s384
      %p388 = scmp.eq.s32.totalorder %s25, 0
      %p389 = por %p387, %p388
      %p390 = scmp.ne.s32.totalorder %s382, %s384
      %p391 = scmp.eq.s32.totalorder %s30, 3
      %p392 = por %p390, %p391
      %p393 = scmp.ne.s32.totalorder %s384, %s385
      %p394 = scmp.eq.s32.totalorder %s30, 0
      %p395 = por %p393, %p394
      %p396 = scmp.ne.s32.totalorder %s384, %s385
      %p397 = scmp.eq.s32.totalorder %s31, 3
      %p398 = por %p396, %p397
      %p400 = scmp.ne.s32.totalorder %s385, %s399
      %p401 = scmp.eq.s32.totalorder %s31, 0
      %p402 = por %p400, %p401
      %s404 = sadd.s32 %s403, 1
      %p407 = scmp.eq.s32.totalorder %s25, 3
      %p408 = scmp.ne.s32.totalorder %s403, %s405
      %p409 = scmp.eq.s32.totalorder %s25, 0
      %p410 = por %p408, %p409
      %p411 = scmp.ne.s32.totalorder %s403, %s405
      %p412 = scmp.eq.s32.totalorder %s30, 3
      %p413 = por %p411, %p412
      %p414 = scmp.ne.s32.totalorder %s405, %s406
      %p415 = scmp.eq.s32.totalorder %s30, 0
      %p416 = por %p414, %p415
      %p417 = scmp.ne.s32.totalorder %s405, %s406
      %p418 = scmp.eq.s32.totalorder %s31, 3
      %p419 = por %p417, %p418
      %p421 = scmp.ne.s32.totalorder %s406, %s420
      %p422 = scmp.eq.s32.totalorder %s31, 0
      %p423 = por %p421, %p422
      %s425 = sadd.s32 %s424, 1
      %p428 = scmp.eq.s32.totalorder %s25, 3
      %p429 = scmp.ne.s32.totalorder %s424, %s426
      %p430 = scmp.eq.s32.totalorder %s25, 0
      %p431 = por %p429, %p430
      %p432 = scmp.ne.s32.totalorder %s424, %s426
      %p433 = scmp.eq.s32.totalorder %s30, 3
      %p434 = por %p432, %p433
      %p435 = scmp.ne.s32.totalorder %s426, %s427
      %p436 = scmp.eq.s32.totalorder %s30, 0
      %p437 = por %p435, %p436
      %p438 = scmp.ne.s32.totalorder %s426, %s427
      %p439 = scmp.eq.s32.totalorder %s31, 3
      %p440 = por %p438, %p439
      %p442 = scmp.ne.s32.totalorder %s427, %s441
      %p443 = scmp.eq.s32.totalorder %s31, 0
      %p444 = por %p442, %p443
      %s445 = ssub.s32 %s32, %s44
      %p446 = scmp.eq.s32.totalorder %s445, 0
      %s448 = sadd.s32 %s447, 1
      %s449 = scalar_select %p446, %s447, %s448
      %p452 = pneg %p446
      %p453 = scmp.eq.s32.totalorder %s25, 3
      %p454 = por %p452, %p453
      %p455 = scmp.ne.s32.totalorder %s447, %s450
      %p456 = scmp.eq.s32.totalorder %s25, 0
      %p457 = por %p455, %p456
      %p458 = scmp.ne.s32.totalorder %s447, %s450
      %p459 = scmp.eq.s32.totalorder %s30, 3
      %p460 = por %p458, %p459
      %p461 = scmp.ne.s32.totalorder %s450, %s451
      %p462 = scmp.eq.s32.totalorder %s30, 0
      %p463 = por %p461, %p462
      %p464 = scmp.ne.s32.totalorder %s450, %s451
      %p465 = scmp.eq.s32.totalorder %s31, 3
      %p466 = por %p464, %p465
      %p468 = scmp.ne.s32.totalorder %s451, %s467
      %p469 = scmp.eq.s32.totalorder %s31, 0
      %p470 = por %p468, %p469
      %p471 = scmp.le.s32.totalorder 1, %s25
      %p472 = scmp.lt.s32.totalorder %s25, 5
      %p473 = pnand %p471, %p472
      %p474 = pneg %p473
      // Predicated region
      $region9: #{text_residual_attention_block.1} parent=5 // pred_check
        _
      $region10: #{text_residual_attention_block.1} parent=5 // pred_check_branch
        %476 = sbr.rel (%p473) target = $region12
      $region11: #{text_residual_attention_block.1} parent=5 // pred_region
        %s477 = ssub.s32 %s25, 1
        // Predicated region
        $region13: #{text_residual_attention_block.1} parent=11 // pred_check
          %p478 = pneg %p164
        $region14: #{text_residual_attention_block.1} parent=11 // pred_check_branch
          %480 = sbr.rel (%p478) target = $region16
        $region15: #{text_residual_attention_block.1} parent=11 // pred_region
          _
        $region16: #{text_residual_attention_block.1} parent=11 // pred_fallthru
          _
        // Predicated region
        $region17: #{text_residual_attention_block.1} parent=11 // pred_check
          %p481 = pneg %p185
        $region18: #{text_residual_attention_block.1} parent=11 // pred_check_branch
          %483 = sbr.rel (%p481) target = $region20
        $region19: #{text_residual_attention_block.1} parent=11 // pred_region
          _
        $region20: #{text_residual_attention_block.1} parent=11 // pred_fallthru
          _
        // Predicated region
        $region21: #{text_residual_attention_block.1} parent=11 // pred_check
          %p484 = pneg %p206
        $region22: #{text_residual_attention_block.1} parent=11 // pred_check_branch
          %486 = sbr.rel (%p484) target = $region24
        $region23: #{text_residual_attention_block.1} parent=11 // pred_region
          _
        $region24: #{text_residual_attention_block.1} parent=11 // pred_fallthru
          _
        // Predicated region
        $region25: #{text_residual_attention_block.1} parent=11 // pred_check
          %p487 = pneg %p227
        $region26: #{text_residual_attention_block.1} parent=11 // pred_check_branch
          %489 = sbr.rel (%p487) target = $region28
        $region27: #{text_residual_attention_block.1} parent=11 // pred_region
          _
        $region28: #{text_residual_attention_block.1} parent=11 // pred_fallthru
          _
        // Predicated region
        $region29: #{text_residual_attention_block.1} parent=11 // pred_check
          %p490 = pneg %p248
        $region30: #{text_residual_attention_block.1} parent=11 // pred_check_branch
          %492 = sbr.rel (%p490) target = $region32
        $region31: #{text_residual_attention_block.1} parent=11 // pred_region
          _
        $region32: #{text_residual_attention_block.1} parent=11 // pred_fallthru
          _
        // Predicated region
        $region33: #{text_residual_attention_block.1} parent=11 // pred_check
          %p493 = pneg %p269
        $region34: #{text_residual_attention_block.1} parent=11 // pred_check_branch
          %495 = sbr.rel (%p493) target = $region36
        $region35: #{text_residual_attention_block.1} parent=11 // pred_region
          _
        $region36: #{text_residual_attention_block.1} parent=11 // pred_fallthru
          _
        // Predicated region
        $region37: #{text_residual_attention_block.1} parent=11 // pred_check
          %p496 = pneg %p290
        $region38: #{text_residual_attention_block.1} parent=11 // pred_check_branch
          %498 = sbr.rel (%p496) target = $region40
        $region39: #{text_residual_attention_block.1} parent=11 // pred_region
          _
        $region40: #{text_residual_attention_block.1} parent=11 // pred_fallthru
          _
        // Predicated region
        $region41: #{text_residual_attention_block.1} parent=11 // pred_check
          %p499 = pneg %p311
        $region42: #{text_residual_attention_block.1} parent=11 // pred_check_branch
          %501 = sbr.rel (%p499) target = $region44
        $region43: #{text_residual_attention_block.1} parent=11 // pred_region
          _
        $region44: #{text_residual_attention_block.1} parent=11 // pred_fallthru
          _
        // Predicated region
        $region45: #{text_residual_attention_block.1} parent=11 // pred_check
          %p502 = pneg %p332
        $region46: #{text_residual_attention_block.1} parent=11 // pred_check_branch
          %504 = sbr.rel (%p502) target = $region48
        $region47: #{text_residual_attention_block.1} parent=11 // pred_region
          _
        $region48: #{text_residual_attention_block.1} parent=11 // pred_fallthru
          _
        // Predicated region
        $region49: #{text_residual_attention_block.1} parent=11 // pred_check
          %p505 = pneg %p353
        $region50: #{text_residual_attention_block.1} parent=11 // pred_check_branch
          %507 = sbr.rel (%p505) target = $region52
        $region51: #{text_residual_attention_block.1} parent=11 // pred_region
          %s509 = ssub.s32 16, 16
          %510 = vsyncadd [#allocation5], %s509
          %s512 = sshll.u32 [#allocation4], 4
          %s513 = int_to_ptr.vmem [resolvable:$true] %s512
          %515 = dma.hbm_to_vmem [thread:$0]  %s13, 16, %s513, [#allocation5]
        $region52: #{text_residual_attention_block.1} parent=11 // pred_fallthru
          _
        // Predicated region
        $region53: #{text_residual_attention_block.1} parent=11 // pred_check
          %p516 = pneg %p374
        $region54: #{text_residual_attention_block.1} parent=11 // pred_check_branch
          %518 = sbr.rel (%p516) target = $region56
        $region55: #{text_residual_attention_block.1} parent=11 // pred_region
          _
        $region56: #{text_residual_attention_block.1} parent=11 // pred_fallthru
          _
        // Predicated region
        $region57: #{text_residual_attention_block.1} parent=11 // pred_check
          %p519 = pneg %p395
        $region58: #{text_residual_attention_block.1} parent=11 // pred_check_branch
          %521 = sbr.rel (%p519) target = $region60
        $region59: #{text_residual_attention_block.1} parent=11 // pred_region
          _
        $region60: #{text_residual_attention_block.1} parent=11 // pred_fallthru
          _
        // Predicated region
        $region61: #{text_residual_attention_block.1} parent=11 // pred_check
          %p522 = pneg %p416
        $region62: #{text_residual_attention_block.1} parent=11 // pred_check_branch
          %524 = sbr.rel (%p522) target = $region64
        $region63: #{text_residual_attention_block.1} parent=11 // pred_region
          _
        $region64: #{text_residual_attention_block.1} parent=11 // pred_fallthru
          _
        // Predicated region
        $region65: #{text_residual_attention_block.1} parent=11 // pred_check
          %p525 = pneg %p437
        $region66: #{text_residual_attention_block.1} parent=11 // pred_check_branch
          %527 = sbr.rel (%p525) target = $region68
        $region67: #{text_residual_attention_block.1} parent=11 // pred_region
          _
        $region68: #{text_residual_attention_block.1} parent=11 // pred_fallthru
          _
      $region12: #{text_residual_attention_block.1} parent=5 // pred_fallthru
        _
      %p528 = scmp.lt.s32.totalorder %s25, 4
      // Predicated region
      $region69: #{text_residual_attention_block.1} parent=5 // pred_check
        %p529 = pneg %p528
      $region70: #{text_residual_attention_block.1} parent=5 // pred_check_branch
        %531 = sbr.rel (%p529) target = $region72
      $region71: #{text_residual_attention_block.1} parent=5 // pred_region
        // Predicated region
        $region73: #{text_residual_attention_block.1} parent=71 // pred_check
          %p532 = pneg %p57
        $region74: #{text_residual_attention_block.1} parent=71 // pred_check_branch
          %534 = sbr.rel (%p532) target = $region76
        $region75: #{text_residual_attention_block.1} parent=71 // pred_region
          %p535 = scmp.lt.s32.totalorder %s32, 1
          %s536 = scalar_select %p535, %s32, 1
          %s537 = smul.addr %s536, 8
          %s538 = scalar_lea.vmem %s0, %s537
        $region76: #{text_residual_attention_block.1} parent=71 // pred_fallthru
          _
        // Predicated region
        $region77: #{text_residual_attention_block.1} parent=71 // pred_check
          %p539 = pneg %p85
        $region78: #{text_residual_attention_block.1} parent=71 // pred_check_branch
          %541 = sbr.rel (%p539) target = $region80
        $region79: #{text_residual_attention_block.1} parent=71 // pred_region
          %p542 = scmp.lt.s32.totalorder %s32, 1
          %s543 = scalar_select %p542, %s32, 1
          %p544 = scmp.lt.s32.totalorder %s33, 1
          %s545 = scalar_select %p544, %s33, 1
          %s546 = smul.addr %s543, 2
          %s547 = sadd.s32 %s545, %s546
          %s548 = smul.addr %s547, 8
          %s549 = scalar_lea.vmem %s1, %s548
        $region80: #{text_residual_attention_block.1} parent=71 // pred_fallthru
          _
        // Predicated region
        $region81: #{text_residual_attention_block.1} parent=71 // pred_check
          %p550 = pneg %p111
        $region82: #{text_residual_attention_block.1} parent=71 // pred_check_branch
          %552 = sbr.rel (%p550) target = $region84
        $region83: #{text_residual_attention_block.1} parent=71 // pred_region
          %p553 = scmp.lt.s32.totalorder %s32, 1
          %s554 = scalar_select %p553, %s32, 1
          %s555 = smul.addr %s554, 8
          %s556 = scalar_lea.vmem %s2, %s555
        $region84: #{text_residual_attention_block.1} parent=71 // pred_fallthru
          _
        // Predicated region
        $region85: #{text_residual_attention_block.1} parent=71 // pred_check
          %p557 = pneg %p137
        $region86: #{text_residual_attention_block.1} parent=71 // pred_check_branch
          %559 = sbr.rel (%p557) target = $region88
        $region87: #{text_residual_attention_block.1} parent=71 // pred_region
          %p560 = scmp.lt.s32.totalorder %s32, 1
          %s561 = scalar_select %p560, %s32, 1
          %s562 = scalar_lea.vmem %s3, %s561
        $region88: #{text_residual_attention_block.1} parent=71 // pred_fallthru
          _
      $region72: #{text_residual_attention_block.1} parent=5 // pred_fallthru
        _
      %p563 = scmp.le.s32.totalorder 1, %s25
      %p564 = scmp.lt.s32.totalorder %s25, 5
      %p565 = pnand %p563, %p564
      %p566 = pneg %p565
      // Predicated region
      $region89: #{text_residual_attention_block.1} parent=5 // pred_check
        _
      $region90: #{text_residual_attention_block.1} parent=5 // pred_check_branch
        %568 = sbr.rel (%p565) target = $region92
      $region91: #{text_residual_attention_block.1} parent=5 // pred_region
        %s569 = ssub.s32 %s25, 1
        // Predicated region
        $region93: #{text_residual_attention_block.1} parent=91 // pred_check
          %p570 = pneg %p353
        $region94: #{text_residual_attention_block.1} parent=91 // pred_check_branch
          %572 = sbr.rel (%p570) target = $region96
        $region95: #{text_residual_attention_block.1} parent=91 // pred_region
          %573 = dma.done [#allocation5], 16
        $region96: #{text_residual_attention_block.1} parent=91 // pred_fallthru
          _
        %p574 = scmp.lt.s32.totalorder %s34, 1
        %s575 = scalar_select %p574, %s34, 1
        %s576 = smul.addr %s575, 8
        %s577 = scalar_lea.vmem %s0, %s576
        %p578 = pneg %p63
        %p579 = pneg %p60
        %p580 = scmp.lt.s32.totalorder %s34, 1
        %s581 = scalar_select %p580, %s34, 1
        %p582 = scmp.lt.s32.totalorder %s35, 1
        %s583 = scalar_select %p582, %s35, 1
        %s584 = smul.addr %s581, 2
        %s585 = sadd.s32 %s583, %s584
        %s586 = smul.addr %s585, 8
        %s587 = scalar_lea.vmem %s1, %s586
        %p588 = pneg %p91
        %p589 = pneg %p88
        %p590 = scmp.lt.s32.totalorder %s34, 1
        %s591 = scalar_select %p590, %s34, 1
        %s592 = smul.addr %s591, 8
        %s593 = scalar_lea.vmem %s2, %s592
        %p594 = pneg %p117
        %p595 = pneg %p114
        %p596 = scmp.lt.s32.totalorder %s34, 1
        %s597 = scalar_select %p596, %s34, 1
        %s598 = scalar_lea.vmem %s3, %s597
        %p599 = pneg %p143
        %p600 = pneg %p140
        %p601 = pneg %p164
        %p602 = pneg %p161
        %p603 = pneg %p185
        %p604 = pneg %p182
        %p605 = pneg %p206
        %p606 = pneg %p203
        %p607 = pneg %p227
        %p608 = pneg %p224
        %p609 = pneg %p248
        %p610 = pneg %p245
        %p611 = pneg %p269
        %p612 = pneg %p266
        %p613 = pneg %p290
        %p614 = pneg %p287
        %p615 = pneg %p311
        %p616 = pneg %p308
        %p617 = pneg %p332
        %p618 = pneg %p329
        %p619 = pneg %p353
        %p620 = pneg %p350
        %p621 = pneg %p374
        %p622 = pneg %p371
        %p623 = pneg %p395
        %p624 = pneg %p392
        %p625 = pneg %p416
        %p626 = pneg %p413
        %p627 = pneg %p437
        %p628 = pneg %p434
        %p629 = pneg %p463
        %p630 = pneg %p460
        %p631 = scmp.lt.s32.totalorder %s34, 1
        %s632 = scalar_select %p631, %s34, 1
        %s633 = smul.addr %s632, 8
        %s634 = scalar_lea.vmem %s18, %s633
        %p635 = scmp.lt.s32.totalorder %s34, 1
        %s636 = scalar_select %p635, %s34, 1
        %s637 = smul.addr %s636, 8
        %s638 = scalar_lea.vmem %s0, %s637
        %p639 = scmp.lt.s32.totalorder %s34, 1
        %s640 = scalar_select %p639, %s34, 1
        %p641 = scmp.lt.s32.totalorder %s35, 1
        %s642 = scalar_select %p641, %s35, 1
        %s643 = smul.addr %s640, 2
        %s644 = sadd.s32 %s642, %s643
        %s645 = smul.addr %s644, 8
        %s646 = scalar_lea.vmem %s1, %s645
        %p647 = scmp.lt.s32.totalorder %s34, 1
        %s648 = scalar_select %p647, %s34, 1
        %s649 = smul.addr %s648, 8
        %s650 = scalar_lea.vmem %s2, %s649
        %p651 = scmp.lt.s32.totalorder %s34, 1
        %s652 = scalar_select %p651, %s34, 1
        %s653 = scalar_lea.vmem %s3, %s652
        %p654 = scmp.lt.s32.totalorder %s34, 1
        %s655 = scalar_select %p654, %s34, 1
        %s656 = smul.addr %s655, 8
        %s657 = scalar_lea.vmem %s18, %s656
        %p658 = scmp.eq.s32.totalorder %s35, 0
        // Predicated region
        $region97: #{text_residual_attention_block.1} parent=91 // pred_check
          %p659 = pneg %p658
        $region98: #{text_residual_attention_block.1} parent=91 // pred_check_branch
          %661 = sbr.rel (%p659) target = $region100
        $region99: #{text_residual_attention_block.1} parent=91 // pred_region
          %v662 = vld [vmem:[%s638] sm:$0xff]
          %v663 = vld [vmem:[%s6] sm:$0xff]
          %v664 = vld [vmem:[%s6 + $0x8] sm:$0xff]
          %v665 = vld [vmem:[%s6 + $0x10] sm:$0xff]
          %v666 = vld [vmem:[%s6 + $0x18] sm:$0xff]
          %v667 = vld [vmem:[%s7] sm:$0x1]
          %v669 = vlaneseq
          %v670 = vshrl.u32 %v669, 7
          %v671 = vsub.s32 0, %v670
          %v672 = vrot.slane %v667, %v671
          %vm674 = vcmask 261120
          %v676 = vsel %vm674, %v662, 0
          %678 = vmatprep.subr.mxu0 0.0
          %679 = vmatpush1.msra.mxu0 %v663
          %680 = vmatprep.subr.mxu0 0.0
          %681 = vmatpush1.msra.mxu0 %v664
          %682 = vmatprep.subr.mxu0 0.0
          %683 = vmatpush1.msra.mxu0 %v665
          %684 = vmatprep.subr.mxu0 0.0
          %685 = vmatpush1.msra.mxu0 %v666
          %686 = vmatprep.subr.mxu0 0.0
          %687 = vmatpush1.msra.mxu0 0.0
          %688 = vmatprep.subr.mxu0 0.0
          %689 = vmatpush1.msra.mxu0 0.0
          %690 = vmatprep.subr.mxu0 0.0
          %691 = vmatpush1.msra.mxu0 0.0
          %692 = vmatprep.subr.mxu0 0.0
          %693 = vmatpush1.msra.mxu0 0.0
          %694 = vmatprep.subr.mxu0 0.0
          %695 = vmatpush1.msra.mxu0 0.0
          %696 = vmatprep.subr.mxu0 0.0
          %697 = vmatpush1.msra.mxu0 0.0
          %698 = vmatprep.subr.mxu0 0.0
          %699 = vmatpush1.msra.mxu0 0.0
          %700 = vmatprep.subr.mxu0 0.0
          %701 = vmatpush1.msra.mxu0 0.0
          %702 = vmatprep.subr.mxu0 0.0
          %703 = vmatpush1.msra.mxu0 0.0
          %704 = vmatprep.subr.mxu0 0.0
          %705 = vmatpush1.msra.mxu0 0.0
          %706 = vmatprep.subr.mxu0 0.0
          %707 = vmatpush1.msra.mxu0 0.0
          %708 = vmatprep.subr.mxu0 0.0
          %709 = vmatpush1.msra.mxu0 0.0
          %710 = vmatprep.subr.mxu0 0.0
          %711 = vmatpush1.msra.mxu0 0.0
          %712 = vmatprep.subr.mxu0 0.0
          %713 = vmatpush1.msra.mxu0 0.0
          %714 = vmatprep.subr.mxu0 0.0
          %715 = vmatpush1.msra.mxu0 0.0
          %716 = vmatprep.subr.mxu0 0.0
          %717 = vmatpush1.msra.mxu0 0.0
          %718 = vmatprep.subr.mxu0 0.0
          %719 = vmatpush1.msra.mxu0 0.0
          %720 = vmatprep.subr.mxu0 0.0
          %721 = vmatpush1.msra.mxu0 0.0
          %722 = vmatprep.subr.mxu0 0.0
          %723 = vmatpush1.msra.mxu0 0.0
          %724 = vmatprep.subr.mxu0 0.0
          %725 = vmatpush1.msra.mxu0 0.0
          %726 = vmatprep.subr.mxu0 0.0
          %727 = vmatpush1.msra.mxu0 0.0
          %728 = vmatprep.subr.mxu0 0.0
          %729 = vmatpush1.msra.mxu0 0.0
          %730 = vmatprep.subr.mxu0 0.0
          %731 = vmatpush1.msra.mxu0 0.0
          %732 = vmatprep.subr.mxu0 0.0
          %733 = vmatpush1.msra.mxu0 0.0
          %734 = vmatprep.subr.mxu0 0.0
          %735 = vmatpush1.msra.mxu0 0.0
          %736 = vmatprep.subr.mxu0 0.0
          %737 = vmatpush1.msra.mxu0 0.0
          %738 = vmatprep.subr.mxu0 0.0
          %739 = vmatpush1.msra.mxu0 0.0
          %740 = vmatprep.subr.mxu0 0.0
          %741 = vmatpush1.msra.mxu0 0.0
          %742 = vmatprep.mubr.f32.mxu0 0.0
          %743 = vmatmul.mubr.f32.gmra.mrb[0].mxu0 %v676
          %v744 = vpop.f32.mrb[0].mxu0
          %v745 = vadd.f32 %v672, %v744
          %v746 = vpop.f32.mrb[0].mxu0
          %747 = vdwg.mxu0
          %v748 = vsel %vm674, %v745, 0.0
          %v749 = vrot.slane %v748, 4
          %v750 = vadd.f32 %v748, %v749
          %v751 = vrot.slane %v750, 2
          %v752 = vadd.f32 %v750, %v751
          %v753 = vrot.slane %v752, 1
          %v754 = vadd.f32 %v752, %v753
          %v755 = vrcp.pop 8.0
          %v756 = vmul.f32 %v754, %v755
          %v757 = vsub.f32 %v745, %v756
          %v758 = vmul.f32 %v757, %v757
          %v759 = vsel %vm674, %v758, 0.0
          %v760 = vrot.slane %v759, 4
          %v761 = vadd.f32 %v759, %v760
          %v762 = vrot.slane %v761, 2
          %v763 = vadd.f32 %v761, %v762
          %v764 = vrot.slane %v763, 1
          %v765 = vadd.f32 %v763, %v764
          %v766 = vmul.f32 %v765, %v755
          %v767 = vadd.f32 %v766, 1e-05
          %v768 = vrsqrt.pop %v767
          %v769 = vmul.f32 %v757, %v768
          %v770 = vld [vmem:[%s650] sm:$0xff]
          %772 = vset.pattern.permute.xlu0 0
          %773 = vperm.xlu0 %772, %v770
          %v774 = vpop.permute.xlu0 %773
          %v776 = vmul.f32 %v769, %v774
          %v777 = vmul.f32 %v776, 0.17677669
          %778 = vst.msk [vmem:[#allocation2] sm:$0xff] %vm674, %v777
          %779 = vst.msk [vmem:[#allocation3] sm:$0xff] %vm674, 0.0
        $region100: #{text_residual_attention_block.1} parent=91 // pred_fallthru
          _
        %v780 = vld [vmem:[%s646] sm:$0xff]
        %v781 = vld [vmem:[%s4] sm:$0xff]
        %v782 = vld [vmem:[%s4 + $0x8] sm:$0xff]
        %v783 = vld [vmem:[%s4 + $0x10] sm:$0xff]
        %v784 = vld [vmem:[%s4 + $0x18] sm:$0xff]
        %v785 = vld [vmem:[%s4 + $0x20] sm:$0xff]
        %v786 = vld [vmem:[%s4 + $0x28] sm:$0xff]
        %v787 = vld [vmem:[%s4 + $0x30] sm:$0xff]
        %v788 = vld [vmem:[%s4 + $0x38] sm:$0xff]
        %v789 = vld [vmem:[%s5] sm:$0x1]
        %v791 = vlaneseq
        %v792 = vshrl.u32 %v791, 7
        %v793 = vsub.s32 0, %v792
        %v794 = vrot.slane %v789, %v793
        %vm796 = vcmask 523264
        %v798 = vsel %vm796, %v780, 0
        %800 = vmatprep.subr.mxu0 0.0
        %801 = vmatpush1.msra.mxu0 %v781
        %802 = vmatprep.subr.mxu0 0.0
        %803 = vmatpush1.msra.mxu0 %v782
        %804 = vmatprep.subr.mxu0 0.0
        %805 = vmatpush1.msra.mxu0 %v783
        %806 = vmatprep.subr.mxu0 0.0
        %807 = vmatpush1.msra.mxu0 %v784
        %808 = vmatprep.subr.mxu0 0.0
        %809 = vmatpush1.msra.mxu0 %v785
        %810 = vmatprep.subr.mxu0 0.0
        %811 = vmatpush1.msra.mxu0 %v786
        %812 = vmatprep.subr.mxu0 0.0
        %813 = vmatpush1.msra.mxu0 %v787
        %814 = vmatprep.subr.mxu0 0.0
        %815 = vmatpush1.msra.mxu0 %v788
        %816 = vmatprep.subr.mxu0 0.0
        %817 = vmatpush1.msra.mxu0 0.0
        %818 = vmatprep.subr.mxu0 0.0
        %819 = vmatpush1.msra.mxu0 0.0
        %820 = vmatprep.subr.mxu0 0.0
        %821 = vmatpush1.msra.mxu0 0.0
        %822 = vmatprep.subr.mxu0 0.0
        %823 = vmatpush1.msra.mxu0 0.0
        %824 = vmatprep.subr.mxu0 0.0
        %825 = vmatpush1.msra.mxu0 0.0
        %826 = vmatprep.subr.mxu0 0.0
        %827 = vmatpush1.msra.mxu0 0.0
        %828 = vmatprep.subr.mxu0 0.0
        %829 = vmatpush1.msra.mxu0 0.0
        %830 = vmatprep.subr.mxu0 0.0
        %831 = vmatpush1.msra.mxu0 0.0
        %832 = vmatprep.subr.mxu0 0.0
        %833 = vmatpush1.msra.mxu0 0.0
        %834 = vmatprep.subr.mxu0 0.0
        %835 = vmatpush1.msra.mxu0 0.0
        %836 = vmatprep.subr.mxu0 0.0
        %837 = vmatpush1.msra.mxu0 0.0
        %838 = vmatprep.subr.mxu0 0.0
        %839 = vmatpush1.msra.mxu0 0.0
        %840 = vmatprep.subr.mxu0 0.0
        %841 = vmatpush1.msra.mxu0 0.0
        %842 = vmatprep.subr.mxu0 0.0
        %843 = vmatpush1.msra.mxu0 0.0
        %844 = vmatprep.subr.mxu0 0.0
        %845 = vmatpush1.msra.mxu0 0.0
        %846 = vmatprep.subr.mxu0 0.0
        %847 = vmatpush1.msra.mxu0 0.0
        %848 = vmatprep.subr.mxu0 0.0
        %849 = vmatpush1.msra.mxu0 0.0
        %850 = vmatprep.subr.mxu0 0.0
        %851 = vmatpush1.msra.mxu0 0.0
        %852 = vmatprep.subr.mxu0 0.0
        %853 = vmatpush1.msra.mxu0 0.0
        %854 = vmatprep.subr.mxu0 0.0
        %855 = vmatpush1.msra.mxu0 0.0
        %856 = vmatprep.subr.mxu0 0.0
        %857 = vmatpush1.msra.mxu0 0.0
        %858 = vmatprep.subr.mxu0 0.0
        %859 = vmatpush1.msra.mxu0 0.0
        %860 = vmatprep.subr.mxu0 0.0
        %861 = vmatpush1.msra.mxu0 0.0
        %862 = vmatprep.subr.mxu0 0.0
        %863 = vmatpush1.msra.mxu0 0.0
        %864 = vmatprep.mubr.f32.mxu0 0.0
        %865 = vmatmul.mubr.f32.gmra.mrb[0].mxu0 %v798
        %v866 = vpop.f32.mrb[0].mxu0
        %v867 = vadd.f32 %v794, %v866
        %v868 = vpop.f32.mrb[0].mxu0
        %869 = vdwg.mxu0
        %v870 = vmul.f32 %v867, 0.5
        %v871 = vmul.f32 %v867, 0.70710677
        %v872 = verf.f32.pop %v871
        %v873 = vadd.f32 %v872, 1.0
        %v874 = vmul.f32 %v870, %v873
        %v875 = vld [vmem:[%s8] sm:$0xff]
        %v876 = vld [vmem:[%s8 + $0x8] sm:$0xff]
        %v877 = vld [vmem:[%s8 + $0x10] sm:$0xff]
        %v878 = vld [vmem:[%s8 + $0x18] sm:$0xff]
        %v879 = vld [vmem:[%s8 + $0x20] sm:$0xff]
        %v880 = vld [vmem:[%s8 + $0x28] sm:$0xff]
        %v881 = vld [vmem:[%s8 + $0x30] sm:$0xff]
        %v882 = vld [vmem:[%s8 + $0x38] sm:$0xff]
        %v883 = vld [vmem:[%s9] sm:$0x1]
        %v885 = vlaneseq
        %v886 = vshrl.u32 %v885, 7
        %v887 = vsub.s32 0, %v886
        %v888 = vrot.slane %v883, %v887
        %v891 = vsel %vm796, %v874, 0
        %893 = vmatprep.subr.mxu0 0.0
        %894 = vmatpush1.msra.mxu0 %v875
        %895 = vmatprep.subr.mxu0 0.0
        %896 = vmatpush1.msra.mxu0 %v876
        %897 = vmatprep.subr.mxu0 0.0
        %898 = vmatpush1.msra.mxu0 %v877
        %899 = vmatprep.subr.mxu0 0.0
        %900 = vmatpush1.msra.mxu0 %v878
        %901 = vmatprep.subr.mxu0 0.0
        %902 = vmatpush1.msra.mxu0 %v879
        %903 = vmatprep.subr.mxu0 0.0
        %904 = vmatpush1.msra.mxu0 %v880
        %905 = vmatprep.subr.mxu0 0.0
        %906 = vmatpush1.msra.mxu0 %v881
        %907 = vmatprep.subr.mxu0 0.0
        %908 = vmatpush1.msra.mxu0 %v882
        %909 = vmatprep.subr.mxu0 0.0
        %910 = vmatpush1.msra.mxu0 0.0
        %911 = vmatprep.subr.mxu0 0.0
        %912 = vmatpush1.msra.mxu0 0.0
        %913 = vmatprep.subr.mxu0 0.0
        %914 = vmatpush1.msra.mxu0 0.0
        %915 = vmatprep.subr.mxu0 0.0
        %916 = vmatpush1.msra.mxu0 0.0
        %917 = vmatprep.subr.mxu0 0.0
        %918 = vmatpush1.msra.mxu0 0.0
        %919 = vmatprep.subr.mxu0 0.0
        %920 = vmatpush1.msra.mxu0 0.0
        %921 = vmatprep.subr.mxu0 0.0
        %922 = vmatpush1.msra.mxu0 0.0
        %923 = vmatprep.subr.mxu0 0.0
        %924 = vmatpush1.msra.mxu0 0.0
        %925 = vmatprep.subr.mxu0 0.0
        %926 = vmatpush1.msra.mxu0 0.0
        %927 = vmatprep.subr.mxu0 0.0
        %928 = vmatpush1.msra.mxu0 0.0
        %929 = vmatprep.subr.mxu0 0.0
        %930 = vmatpush1.msra.mxu0 0.0
        %931 = vmatprep.subr.mxu0 0.0
        %932 = vmatpush1.msra.mxu0 0.0
        %933 = vmatprep.subr.mxu0 0.0
        %934 = vmatpush1.msra.mxu0 0.0
        %935 = vmatprep.subr.mxu0 0.0
        %936 = vmatpush1.msra.mxu0 0.0
        %937 = vmatprep.subr.mxu0 0.0
        %938 = vmatpush1.msra.mxu0 0.0
        %939 = vmatprep.subr.mxu0 0.0
        %940 = vmatpush1.msra.mxu0 0.0
        %941 = vmatprep.subr.mxu0 0.0
        %942 = vmatpush1.msra.mxu0 0.0
        %943 = vmatprep.subr.mxu0 0.0
        %944 = vmatpush1.msra.mxu0 0.0
        %945 = vmatprep.subr.mxu0 0.0
        %946 = vmatpush1.msra.mxu0 0.0
        %947 = vmatprep.subr.mxu0 0.0
        %948 = vmatpush1.msra.mxu0 0.0
        %949 = vmatprep.subr.mxu0 0.0
        %950 = vmatpush1.msra.mxu0 0.0
        %951 = vmatprep.subr.mxu0 0.0
        %952 = vmatpush1.msra.mxu0 0.0
        %953 = vmatprep.subr.mxu0 0.0
        %954 = vmatpush1.msra.mxu0 0.0
        %955 = vmatprep.subr.mxu0 0.0
        %956 = vmatpush1.msra.mxu0 0.0
        %957 = vmatprep.mubr.f32.mxu0 0.0
        %958 = vmatmul.mubr.f32.gmra.mrb[0].mxu0 %v891
        %v959 = vpop.f32.mrb[0].mxu0
        %v960 = vadd.f32 %v888, %v959
        %v961 = vpop.f32.mrb[0].mxu0
        %962 = vdwg.mxu0
        %v963 = vld [vmem:[%s10] sm:$0xff]
        %v964 = vld [vmem:[%s10 + $0x8] sm:$0xff]
        %v965 = vld [vmem:[%s10 + $0x10] sm:$0xff]
        %v966 = vld [vmem:[%s10 + $0x18] sm:$0xff]
        %v967 = vld [vmem:[%s10 + $0x20] sm:$0xff]
        %v968 = vld [vmem:[%s10 + $0x28] sm:$0xff]
        %v969 = vld [vmem:[%s10 + $0x30] sm:$0xff]
        %v970 = vld [vmem:[%s10 + $0x38] sm:$0xff]
        %v971 = vld [vmem:[%s11] sm:$0x1]
        %v973 = vlaneseq
        %v974 = vshrl.u32 %v973, 7
        %v975 = vsub.s32 0, %v974
        %v976 = vrot.slane %v971, %v975
        %978 = vmatprep.subr.mxu0 0.0
        %979 = vmatpush1.msra.mxu0 %v963
        %980 = vmatprep.subr.mxu0 0.0
        %981 = vmatpush1.msra.mxu0 %v964
        %982 = vmatprep.subr.mxu0 0.0
        %983 = vmatpush1.msra.mxu0 %v965
        %984 = vmatprep.subr.mxu0 0.0
        %985 = vmatpush1.msra.mxu0 %v966
        %986 = vmatprep.subr.mxu0 0.0
        %987 = vmatpush1.msra.mxu0 %v967
        %988 = vmatprep.subr.mxu0 0.0
        %989 = vmatpush1.msra.mxu0 %v968
        %990 = vmatprep.subr.mxu0 0.0
        %991 = vmatpush1.msra.mxu0 %v969
        %992 = vmatprep.subr.mxu0 0.0
        %993 = vmatpush1.msra.mxu0 %v970
        %994 = vmatprep.subr.mxu0 0.0
        %995 = vmatpush1.msra.mxu0 0.0
        %996 = vmatprep.subr.mxu0 0.0
        %997 = vmatpush1.msra.mxu0 0.0
        %998 = vmatprep.subr.mxu0 0.0
        %999 = vmatpush1.msra.mxu0 0.0
        %1000 = vmatprep.subr.mxu0 0.0
        %1001 = vmatpush1.msra.mxu0 0.0
        %1002 = vmatprep.subr.mxu0 0.0
        %1003 = vmatpush1.msra.mxu0 0.0
        %1004 = vmatprep.subr.mxu0 0.0
        %1005 = vmatpush1.msra.mxu0 0.0
        %1006 = vmatprep.subr.mxu0 0.0
        %1007 = vmatpush1.msra.mxu0 0.0
        %1008 = vmatprep.subr.mxu0 0.0
        %1009 = vmatpush1.msra.mxu0 0.0
        %1010 = vmatprep.subr.mxu0 0.0
        %1011 = vmatpush1.msra.mxu0 0.0
        %1012 = vmatprep.subr.mxu0 0.0
        %1013 = vmatpush1.msra.mxu0 0.0
        %1014 = vmatprep.subr.mxu0 0.0
        %1015 = vmatpush1.msra.mxu0 0.0
        %1016 = vmatprep.subr.mxu0 0.0
        %1017 = vmatpush1.msra.mxu0 0.0
        %1018 = vmatprep.subr.mxu0 0.0
        %1019 = vmatpush1.msra.mxu0 0.0
        %1020 = vmatprep.subr.mxu0 0.0
        %1021 = vmatpush1.msra.mxu0 0.0
        %1022 = vmatprep.subr.mxu0 0.0
        %1023 = vmatpush1.msra.mxu0 0.0
        %1024 = vmatprep.subr.mxu0 0.0
        %1025 = vmatpush1.msra.mxu0 0.0
        %1026 = vmatprep.subr.mxu0 0.0
        %1027 = vmatpush1.msra.mxu0 0.0
        %1028 = vmatprep.subr.mxu0 0.0
        %1029 = vmatpush1.msra.mxu0 0.0
        %1030 = vmatprep.subr.mxu0 0.0
        %1031 = vmatpush1.msra.mxu0 0.0
        %1032 = vmatprep.subr.mxu0 0.0
        %1033 = vmatpush1.msra.mxu0 0.0
        %1034 = vmatprep.subr.mxu0 0.0
        %1035 = vmatpush1.msra.mxu0 0.0
        %1036 = vmatprep.subr.mxu0 0.0
        %1037 = vmatpush1.msra.mxu0 0.0
        %1038 = vmatprep.subr.mxu0 0.0
        %1039 = vmatpush1.msra.mxu0 0.0
        %1040 = vmatprep.subr.mxu0 0.0
        %1041 = vmatpush1.msra.mxu0 0.0
        %1042 = vmatprep.mubr.f32.mxu0 0.0
        %1043 = vmatmul.mubr.f32.gmra.mrb[0].mxu0 %v891
        %v1044 = vpop.f32.mrb[0].mxu0
        %v1045 = vadd.f32 %v976, %v1044
        %v1046 = vpop.f32.mrb[0].mxu0
        %1047 = vdwg.mxu0
        %v1048 = vld [vmem:[#allocation2] sm:$0xff]
        %v1049 = vld [vmem:[%s653] sm:$0x1]
        %v1051 = vlaneseq
        %v1052 = vshrl.u32 %v1051, 7
        %v1053 = vsub.s32 0, %v1052
        %v1054 = vrot.slane %v1049, %v1053
        %vm1056 = vcmask 261120
        %v1058 = vsel %vm1056, %v960, 0
        %v1061 = vsel %vm1056, %v1048, 0
        %1063 = vmatprep.subr.mxu0 0.0
        %1064 = vmatpush1.xpose.msra.mxu0 %v1061
        %1065 = vmatprep.subr.mxu0 0.0
        %1066 = vmatpush1.xpose.msra.mxu0 0.0
        %1067 = vmatprep.subr.mxu0 0.0
        %1068 = vmatpush1.xpose.msra.mxu0 0.0
        %1069 = vmatprep.subr.mxu0 0.0
        %1070 = vmatpush1.xpose.msra.mxu0 0.0
        %1071 = vmatprep.subr.mxu0 0.0
        %1072 = vmatpush1.xpose.msra.mxu0 0.0
        %1073 = vmatprep.subr.mxu0 0.0
        %1074 = vmatpush1.xpose.msra.mxu0 0.0
        %1075 = vmatprep.subr.mxu0 0.0
        %1076 = vmatpush1.xpose.msra.mxu0 0.0
        %1077 = vmatprep.subr.mxu0 0.0
        %1078 = vmatpush1.xpose.msra.mxu0 0.0
        %1079 = vmatprep.subr.mxu0 0.0
        %1080 = vmatpush1.xpose.msra.mxu0 0.0
        %1081 = vmatprep.subr.mxu0 0.0
        %1082 = vmatpush1.xpose.msra.mxu0 0.0
        %1083 = vmatprep.subr.mxu0 0.0
        %1084 = vmatpush1.xpose.msra.mxu0 0.0
        %1085 = vmatprep.subr.mxu0 0.0
        %1086 = vmatpush1.xpose.msra.mxu0 0.0
        %1087 = vmatprep.subr.mxu0 0.0
        %1088 = vmatpush1.xpose.msra.mxu0 0.0
        %1089 = vmatprep.subr.mxu0 0.0
        %1090 = vmatpush1.xpose.msra.mxu0 0.0
        %1091 = vmatprep.subr.mxu0 0.0
        %1092 = vmatpush1.xpose.msra.mxu0 0.0
        %1093 = vmatprep.subr.mxu0 0.0
        %1094 = vmatpush1.xpose.msra.mxu0 0.0
        %1095 = vmatprep.subr.mxu0 0.0
        %1096 = vmatpush1.xpose.msra.mxu0 0.0
        %1097 = vmatprep.subr.mxu0 0.0
        %1098 = vmatpush1.xpose.msra.mxu0 0.0
        %1099 = vmatprep.subr.mxu0 0.0
        %1100 = vmatpush1.xpose.msra.mxu0 0.0
        %1101 = vmatprep.subr.mxu0 0.0
        %1102 = vmatpush1.xpose.msra.mxu0 0.0
        %1103 = vmatprep.subr.mxu0 0.0
        %1104 = vmatpush1.xpose.msra.mxu0 0.0
        %1105 = vmatprep.subr.mxu0 0.0
        %1106 = vmatpush1.xpose.msra.mxu0 0.0
        %1107 = vmatprep.subr.mxu0 0.0
        %1108 = vmatpush1.xpose.msra.mxu0 0.0
        %1109 = vmatprep.subr.mxu0 0.0
        %1110 = vmatpush1.xpose.msra.mxu0 0.0
        %1111 = vmatprep.subr.mxu0 0.0
        %1112 = vmatpush1.xpose.msra.mxu0 0.0
        %1113 = vmatprep.subr.mxu0 0.0
        %1114 = vmatpush1.xpose.msra.mxu0 0.0
        %1115 = vmatprep.subr.mxu0 0.0
        %1116 = vmatpush1.xpose.msra.mxu0 0.0
        %1117 = vmatprep.subr.mxu0 0.0
        %1118 = vmatpush1.xpose.msra.mxu0 0.0
        %1119 = vmatprep.subr.mxu0 0.0
        %1120 = vmatpush1.xpose.msra.mxu0 0.0
        %1121 = vmatprep.subr.mxu0 0.0
        %1122 = vmatpush1.xpose.msra.mxu0 0.0
        %1123 = vmatprep.subr.mxu0 0.0
        %1124 = vmatpush1.xpose.msra.mxu0 0.0
        %1125 = vmatprep.subr.mxu0 0.0
        %1126 = vmatpush1.xpose.msra.mxu0 0.0
        %1127 = vmatprep.mubr.f32.mxu0 0.0
        %1128 = vmatmul.mubr.f32.gmra.mrb[0].mxu0 %v1058
        %v1129 = vpop.f32.mrb[0].mxu0
        %v1130 = vadd.f32 %v1054, %v1129
        %v1131 = vpop.f32.mrb[0].mxu0
        %1132 = vdwg.mxu0
        %vm1133 = vcmask 64512
        %v1134 = vsel %vm1133, %v1130, -inf
        %1135 = vmax.xlane.f32.xlu0 %v1134
        %v1136 = vpop.xlane.xlu0 %1135
        %v1137 = vsub.f32 %v1130, %v1136
        %v1138 = vmul.f32 %v1137, 1.442695
        %v1139 = vpow.pop %v1138
        %v1140 = vsel %vm1133, %v1139, 0.0
        %1141 = vadd.xlane.f32.xlu0 %v1140
        %v1142 = vpop.xlane.xlu0 %1141
        %v1143 = vrcp.pop %v1142
        %v1144 = vmul.f32 %v1139, %v1143
        %v1145 = vld [vmem:[#allocation3] sm:$0xff]
        %1146 = vxpose.xlu0.b32.start [1/16] %v1144, 128
        %1147 = vxpose.xlu0.b32.cont [2/16] 0.0, 128
        %1148 = vxpose.xlu0.b32.cont [3/16] 0.0, 128
        %1149 = vxpose.xlu0.b32.cont [4/16] 0.0, 128
        %1150 = vxpose.xlu0.b32.cont [5/16] 0.0, 128
        %1151 = vxpose.xlu0.b32.cont [6/16] 0.0, 128
        %1152 = vxpose.xlu0.b32.cont [7/16] 0.0, 128
        %1153 = vxpose.xlu0.b32.cont [8/16] 0.0, 128
        %1154 = vxpose.xlu0.b32.cont [9/16] 0.0, 128
        %1155 = vxpose.xlu0.b32.cont [10/16] 0.0, 128
        %1156 = vxpose.xlu0.b32.cont [11/16] 0.0, 128
        %1157 = vxpose.xlu0.b32.cont [12/16] 0.0, 128
        %1158 = vxpose.xlu0.b32.cont [13/16] 0.0, 128
        %1159 = vxpose.xlu0.b32.cont [14/16] 0.0, 128
        %1160 = vxpose.xlu0.b32.cont [15/16] 0.0, 128
        %1161 = vxpose.xlu0.b32.end [16/16] 0.0, 128
        %v1162 = vpop.trf.xlu0
        %v1163 = vpop.trf.xlu0
        %v1164 = vpop.trf.xlu0
        %v1165 = vpop.trf.xlu0
        %v1166 = vpop.trf.xlu0
        %v1167 = vpop.trf.xlu0
        %v1168 = vpop.trf.xlu0
        %v1169 = vpop.trf.xlu0
        %v1170 = vpop.trf.xlu0
        %v1171 = vpop.trf.xlu0
        %v1172 = vpop.trf.xlu0
        %v1173 = vpop.trf.xlu0
        %v1174 = vpop.trf.xlu0
        %v1175 = vpop.trf.xlu0
        %v1176 = vpop.trf.xlu0
        %v1177 = vpop.trf.xlu0
        %v1179 = vsel %vm1133, %v1162, 0
        %1181 = vmatprep.subr.mxu0 0.0
        %1182 = vmatpush1.msra.mxu0 %v1045
        %1183 = vmatprep.subr.mxu0 0.0
        %1184 = vmatpush1.msra.mxu0 0.0
        %1185 = vmatprep.subr.mxu0 0.0
        %1186 = vmatpush1.msra.mxu0 0.0
        %1187 = vmatprep.subr.mxu0 0.0
        %1188 = vmatpush1.msra.mxu0 0.0
        %1189 = vmatprep.subr.mxu0 0.0
        %1190 = vmatpush1.msra.mxu0 0.0
        %1191 = vmatprep.subr.mxu0 0.0
        %1192 = vmatpush1.msra.mxu0 0.0
        %1193 = vmatprep.subr.mxu0 0.0
        %1194 = vmatpush1.msra.mxu0 0.0
        %1195 = vmatprep.subr.mxu0 0.0
        %1196 = vmatpush1.msra.mxu0 0.0
        %1197 = vmatprep.subr.mxu0 0.0
        %1198 = vmatpush1.msra.mxu0 0.0
        %1199 = vmatprep.subr.mxu0 0.0
        %1200 = vmatpush1.msra.mxu0 0.0
        %1201 = vmatprep.subr.mxu0 0.0
        %1202 = vmatpush1.msra.mxu0 0.0
        %1203 = vmatprep.subr.mxu0 0.0
        %1204 = vmatpush1.msra.mxu0 0.0
        %1205 = vmatprep.subr.mxu0 0.0
        %1206 = vmatpush1.msra.mxu0 0.0
        %1207 = vmatprep.subr.mxu0 0.0
        %1208 = vmatpush1.msra.mxu0 0.0
        %1209 = vmatprep.subr.mxu0 0.0
        %1210 = vmatpush1.msra.mxu0 0.0
        %1211 = vmatprep.subr.mxu0 0.0
        %1212 = vmatpush1.msra.mxu0 0.0
        %1213 = vmatprep.subr.mxu0 0.0
        %1214 = vmatpush1.msra.mxu0 0.0
        %1215 = vmatprep.subr.mxu0 0.0
        %1216 = vmatpush1.msra.mxu0 0.0
        %1217 = vmatprep.subr.mxu0 0.0
        %1218 = vmatpush1.msra.mxu0 0.0
        %1219 = vmatprep.subr.mxu0 0.0
        %1220 = vmatpush1.msra.mxu0 0.0
        %1221 = vmatprep.subr.mxu0 0.0
        %1222 = vmatpush1.msra.mxu0 0.0
        %1223 = vmatprep.subr.mxu0 0.0
        %1224 = vmatpush1.msra.mxu0 0.0
        %1225 = vmatprep.subr.mxu0 0.0
        %1226 = vmatpush1.msra.mxu0 0.0
        %1227 = vmatprep.subr.mxu0 0.0
        %1228 = vmatpush1.msra.mxu0 0.0
        %1229 = vmatprep.subr.mxu0 0.0
        %1230 = vmatpush1.msra.mxu0 0.0
        %1231 = vmatprep.subr.mxu0 0.0
        %1232 = vmatpush1.msra.mxu0 0.0
        %1233 = vmatprep.subr.mxu0 0.0
        %1234 = vmatpush1.msra.mxu0 0.0
        %1235 = vmatprep.subr.mxu0 0.0
        %1236 = vmatpush1.msra.mxu0 0.0
        %1237 = vmatprep.subr.mxu0 0.0
        %1238 = vmatpush1.msra.mxu0 0.0
        %1239 = vmatprep.subr.mxu0 0.0
        %1240 = vmatpush1.msra.mxu0 0.0
        %1241 = vmatprep.subr.mxu0 0.0
        %1242 = vmatpush1.msra.mxu0 0.0
        %1243 = vmatprep.subr.mxu0 0.0
        %1244 = vmatpush1.msra.mxu0 0.0
        %1245 = vmatprep.mubr.f32.mxu0 0.0
        %1246 = vmatmul.mubr.f32.gmra.mrb[0].mxu0 %v1179
        %v1247 = vpop.f32.mrb[0].mxu0
        %v1248 = vadd.f32 0.0, %v1247
        %v1249 = vpop.f32.mrb[0].mxu0
        %1250 = vdwg.mxu0
        %v1251 = vadd.f32 %v1145, %v1248
        %1252 = vst.msk [vmem:[#allocation3] sm:$0xff] %vm1056, %v1251
        %p1253 = scmp.eq.s32.totalorder %s35, 1
        // Predicated region
        $region101: #{text_residual_attention_block.1} parent=91 // pred_check
          %p1254 = pneg %p1253
        $region102: #{text_residual_attention_block.1} parent=91 // pred_check_branch
          %1256 = sbr.rel (%p1254) target = $region104
        $region103: #{text_residual_attention_block.1} parent=91 // pred_region
          %v1257 = vld [vmem:[%s638] sm:$0xff]
          %v1258 = vld [vmem:[#allocation3] sm:$0xff]
          %v1259 = vld [vmem:[%s12] sm:$0xff]
          %v1260 = vld [vmem:[%s12 + $0x8] sm:$0xff]
          %v1261 = vld [vmem:[%s12 + $0x10] sm:$0xff]
          %v1262 = vld [vmem:[%s12 + $0x18] sm:$0xff]
          %v1263 = vld [vmem:[#allocation4] sm:$0x1]
          %v1265 = vlaneseq
          %v1266 = vshrl.u32 %v1265, 7
          %v1267 = vsub.s32 0, %v1266
          %v1268 = vrot.slane %v1263, %v1267
          %v1271 = vsel %vm1056, %v1258, 0
          %1273 = vmatprep.subr.mxu0 0.0
          %1274 = vmatpush1.msra.mxu0 %v1259
          %1275 = vmatprep.subr.mxu0 0.0
          %1276 = vmatpush1.msra.mxu0 %v1260
          %1277 = vmatprep.subr.mxu0 0.0
          %1278 = vmatpush1.msra.mxu0 %v1261
          %1279 = vmatprep.subr.mxu0 0.0
          %1280 = vmatpush1.msra.mxu0 %v1262
          %1281 = vmatprep.subr.mxu0 0.0
          %1282 = vmatpush1.msra.mxu0 0.0
          %1283 = vmatprep.subr.mxu0 0.0
          %1284 = vmatpush1.msra.mxu0 0.0
          %1285 = vmatprep.subr.mxu0 0.0
          %1286 = vmatpush1.msra.mxu0 0.0
          %1287 = vmatprep.subr.mxu0 0.0
          %1288 = vmatpush1.msra.mxu0 0.0
          %1289 = vmatprep.subr.mxu0 0.0
          %1290 = vmatpush1.msra.mxu0 0.0
          %1291 = vmatprep.subr.mxu0 0.0
          %1292 = vmatpush1.msra.mxu0 0.0
          %1293 = vmatprep.subr.mxu0 0.0
          %1294 = vmatpush1.msra.mxu0 0.0
          %1295 = vmatprep.subr.mxu0 0.0
          %1296 = vmatpush1.msra.mxu0 0.0
          %1297 = vmatprep.subr.mxu0 0.0
          %1298 = vmatpush1.msra.mxu0 0.0
          %1299 = vmatprep.subr.mxu0 0.0
          %1300 = vmatpush1.msra.mxu0 0.0
          %1301 = vmatprep.subr.mxu0 0.0
          %1302 = vmatpush1.msra.mxu0 0.0
          %1303 = vmatprep.subr.mxu0 0.0
          %1304 = vmatpush1.msra.mxu0 0.0
          %1305 = vmatprep.subr.mxu0 0.0
          %1306 = vmatpush1.msra.mxu0 0.0
          %1307 = vmatprep.subr.mxu0 0.0
          %1308 = vmatpush1.msra.mxu0 0.0
          %1309 = vmatprep.subr.mxu0 0.0
          %1310 = vmatpush1.msra.mxu0 0.0
          %1311 = vmatprep.subr.mxu0 0.0
          %1312 = vmatpush1.msra.mxu0 0.0
          %1313 = vmatprep.subr.mxu0 0.0
          %1314 = vmatpush1.msra.mxu0 0.0
          %1315 = vmatprep.subr.mxu0 0.0
          %1316 = vmatpush1.msra.mxu0 0.0
          %1317 = vmatprep.subr.mxu0 0.0
          %1318 = vmatpush1.msra.mxu0 0.0
          %1319 = vmatprep.subr.mxu0 0.0
          %1320 = vmatpush1.msra.mxu0 0.0
          %1321 = vmatprep.subr.mxu0 0.0
          %1322 = vmatpush1.msra.mxu0 0.0
          %1323 = vmatprep.subr.mxu0 0.0
          %1324 = vmatpush1.msra.mxu0 0.0
          %1325 = vmatprep.subr.mxu0 0.0
          %1326 = vmatpush1.msra.mxu0 0.0
          %1327 = vmatprep.subr.mxu0 0.0
          %1328 = vmatpush1.msra.mxu0 0.0
          %1329 = vmatprep.subr.mxu0 0.0
          %1330 = vmatpush1.msra.mxu0 0.0
          %1331 = vmatprep.subr.mxu0 0.0
          %1332 = vmatpush1.msra.mxu0 0.0
          %1333 = vmatprep.subr.mxu0 0.0
          %1334 = vmatpush1.msra.mxu0 0.0
          %1335 = vmatprep.subr.mxu0 0.0
          %1336 = vmatpush1.msra.mxu0 0.0
          %1337 = vmatprep.mubr.f32.mxu0 0.0
          %1338 = vmatmul.mubr.f32.gmra.mrb[0].mxu0 %v1271
          %v1339 = vpop.f32.mrb[0].mxu0
          %v1340 = vadd.f32 %v1268, %v1339
          %v1341 = vpop.f32.mrb[0].mxu0
          %1342 = vdwg.mxu0
          %v1343 = vsel %vm1056, %v1340, 0.0
          %v1344 = vrot.slane %v1343, 4
          %v1345 = vadd.f32 %v1343, %v1344
          %v1346 = vrot.slane %v1345, 2
          %v1347 = vadd.f32 %v1345, %v1346
          %v1348 = vrot.slane %v1347, 1
          %v1349 = vadd.f32 %v1347, %v1348
          %v1350 = vrcp.pop 8.0
          %v1351 = vmul.f32 %v1349, %v1350
          %v1352 = vsub.f32 %v1340, %v1351
          %v1353 = vmul.f32 %v1352, %v1352
          %v1354 = vsel %vm1056, %v1353, 0.0
          %v1355 = vrot.slane %v1354, 4
          %v1356 = vadd.f32 %v1354, %v1355
          %v1357 = vrot.slane %v1356, 2
          %v1358 = vadd.f32 %v1356, %v1357
          %v1359 = vrot.slane %v1358, 1
          %v1360 = vadd.f32 %v1358, %v1359
          %v1361 = vmul.f32 %v1360, %v1350
          %v1362 = vadd.f32 %v1361, 1e-05
          %v1363 = vrsqrt.pop %v1362
          %v1364 = vmul.f32 %v1352, %v1363
          %v1365 = vmul.f32 %v1257, %v1364
          %v1366 = vld [vmem:[%s14] sm:$0xff]
          %v1367 = vld [vmem:[%s14 + $0x8] sm:$0xff]
          %v1368 = vld [vmem:[%s14 + $0x10] sm:$0xff]
          %v1369 = vld [vmem:[%s14 + $0x18] sm:$0xff]
          %v1370 = vld [vmem:[%s15] sm:$0x1]
          %v1372 = vlaneseq
          %v1373 = vshrl.u32 %v1372, 7
          %v1374 = vsub.s32 0, %v1373
          %v1375 = vrot.slane %v1370, %v1374
          %v1378 = vsel %vm1056, %v1365, 0
          %1380 = vmatprep.subr.mxu0 0.0
          %1381 = vmatpush1.msra.mxu0 %v1366
          %1382 = vmatprep.subr.mxu0 0.0
          %1383 = vmatpush1.msra.mxu0 %v1367
          %1384 = vmatprep.subr.mxu0 0.0
          %1385 = vmatpush1.msra.mxu0 %v1368
          %1386 = vmatprep.subr.mxu0 0.0
          %1387 = vmatpush1.msra.mxu0 %v1369
          %1388 = vmatprep.subr.mxu0 0.0
          %1389 = vmatpush1.msra.mxu0 0.0
          %1390 = vmatprep.subr.mxu0 0.0
          %1391 = vmatpush1.msra.mxu0 0.0
          %1392 = vmatprep.subr.mxu0 0.0
          %1393 = vmatpush1.msra.mxu0 0.0
          %1394 = vmatprep.subr.mxu0 0.0
          %1395 = vmatpush1.msra.mxu0 0.0
          %1396 = vmatprep.subr.mxu0 0.0
          %1397 = vmatpush1.msra.mxu0 0.0
          %1398 = vmatprep.subr.mxu0 0.0
          %1399 = vmatpush1.msra.mxu0 0.0
          %1400 = vmatprep.subr.mxu0 0.0
          %1401 = vmatpush1.msra.mxu0 0.0
          %1402 = vmatprep.subr.mxu0 0.0
          %1403 = vmatpush1.msra.mxu0 0.0
          %1404 = vmatprep.subr.mxu0 0.0
          %1405 = vmatpush1.msra.mxu0 0.0
          %1406 = vmatprep.subr.mxu0 0.0
          %1407 = vmatpush1.msra.mxu0 0.0
          %1408 = vmatprep.subr.mxu0 0.0
          %1409 = vmatpush1.msra.mxu0 0.0
          %1410 = vmatprep.subr.mxu0 0.0
          %1411 = vmatpush1.msra.mxu0 0.0
          %1412 = vmatprep.subr.mxu0 0.0
          %1413 = vmatpush1.msra.mxu0 0.0
          %1414 = vmatprep.subr.mxu0 0.0
          %1415 = vmatpush1.msra.mxu0 0.0
          %1416 = vmatprep.subr.mxu0 0.0
          %1417 = vmatpush1.msra.mxu0 0.0
          %1418 = vmatprep.subr.mxu0 0.0
          %1419 = vmatpush1.msra.mxu0 0.0
          %1420 = vmatprep.subr.mxu0 0.0
          %1421 = vmatpush1.msra.mxu0 0.0
          %1422 = vmatprep.subr.mxu0 0.0
          %1423 = vmatpush1.msra.mxu0 0.0
          %1424 = vmatprep.subr.mxu0 0.0
          %1425 = vmatpush1.msra.mxu0 0.0
          %1426 = vmatprep.subr.mxu0 0.0
          %1427 = vmatpush1.msra.mxu0 0.0
          %1428 = vmatprep.subr.mxu0 0.0
          %1429 = vmatpush1.msra.mxu0 0.0
          %1430 = vmatprep.subr.mxu0 0.0
          %1431 = vmatpush1.msra.mxu0 0.0
          %1432 = vmatprep.subr.mxu0 0.0
          %1433 = vmatpush1.msra.mxu0 0.0
          %1434 = vmatprep.subr.mxu0 0.0
          %1435 = vmatpush1.msra.mxu0 0.0
          %1436 = vmatprep.subr.mxu0 0.0
          %1437 = vmatpush1.msra.mxu0 0.0
          %1438 = vmatprep.subr.mxu0 0.0
          %1439 = vmatpush1.msra.mxu0 0.0
          %1440 = vmatprep.subr.mxu0 0.0
          %1441 = vmatpush1.msra.mxu0 0.0
          %1442 = vmatprep.subr.mxu0 0.0
          %1443 = vmatpush1.msra.mxu0 0.0
          %1444 = vmatprep.mubr.f32.mxu0 0.0
          %1445 = vmatmul.mubr.f32.gmra.mrb[0].mxu0 %v1378
          %v1446 = vpop.f32.mrb[0].mxu0
          %v1447 = vadd.f32 %v1375, %v1446
          %v1448 = vpop.f32.mrb[0].mxu0
          %1449 = vdwg.mxu0
          %v1450 = vmul.f32 %v1447, 0.5
          %v1451 = vmul.f32 %v1447, 0.70710677
          %v1452 = verf.f32.pop %v1451
          %v1453 = vadd.f32 %v1452, 1.0
          %v1454 = vmul.f32 %v1450, %v1453
          %v1455 = vsel %vm1056, %v1454, 0.0
          %1456 = vadd.xlane.f32.xlu0 %v1455
          %v1457 = vpop.xlane.xlu0 %1456
          %v1458 = vrcp.pop 32.0
          %v1459 = vmul.f32 %v1457, %v1458
          %v1460 = vsub.f32 %v1454, %v1459
          %v1461 = vmul.f32 %v1460, %v1460
          %v1462 = vsel %vm1056, %v1461, 0.0
          %1463 = vadd.xlane.f32.xlu0 %v1462
          %v1464 = vpop.xlane.xlu0 %1463
          %v1465 = vmul.f32 %v1464, %v1458
          %v1466 = vadd.f32 %v1465, 1e-05
          %v1467 = vrsqrt.pop %v1466
          %v1468 = vmul.f32 %v1460, %v1467
          %v1469 = vld [vmem:[%s16] sm:$0x1]
          %v1471 = vlaneseq
          %v1472 = vshrl.u32 %v1471, 7
          %v1473 = vsub.s32 0, %v1472
          %v1474 = vrot.slane %v1469, %v1473
          %v1476 = vmul.f32 %v1468, %v1474
          %v1477 = vld [vmem:[%s17] sm:$0x1]
          %v1479 = vlaneseq
          %v1480 = vshrl.u32 %v1479, 7
          %v1481 = vsub.s32 0, %v1480
          %v1482 = vrot.slane %v1477, %v1481
          %v1484 = vadd.f32 %v1476, %v1482
          %1485 = vst.msk [vmem:[%s657] sm:$0xff] %vm1056, %v1484
        $region104: #{text_residual_attention_block.1} parent=91 // pred_fallthru
          _
        %p1486 = scmp.lt.s32.totalorder %s34, 1
        %s1487 = scalar_select %p1486, %s34, 1
        %s1488 = smul.addr %s1487, 8
        %s1489 = scalar_lea.vmem %s18, %s1488
        // Predicated region
        $region105: #{text_residual_attention_block.1} parent=91 // pred_check
          %p1490 = pneg %p460
        $region106: #{text_residual_attention_block.1} parent=91 // pred_check_branch
          %1492 = sbr.rel (%p1490) target = $region108
        $region107: #{text_residual_attention_block.1} parent=91 // pred_region
          _
        $region108: #{text_residual_attention_block.1} parent=91 // pred_fallthru
          _
      $region92: #{text_residual_attention_block.1} parent=5 // pred_fallthru
        _
      %p1493 = scmp.le.s32.totalorder 2, %s25
      // Predicated region
      $region109: #{text_residual_attention_block.1} parent=5 // pred_check
        %p1494 = pneg %p1493
      $region110: #{text_residual_attention_block.1} parent=5 // pred_check_branch
        %1496 = sbr.rel (%p1494) target = $region112
      $region111: #{text_residual_attention_block.1} parent=5 // pred_region
        %s1497 = ssub.s32 %s25, 2
        // Predicated region
        $region113: #{text_residual_attention_block.1} parent=111 // pred_check
          %p1498 = pneg %p466
        $region114: #{text_residual_attention_block.1} parent=111 // pred_check_branch
          %1500 = sbr.rel (%p1498) target = $region116
        $region115: #{text_residual_attention_block.1} parent=111 // pred_region
          %p1501 = scmp.lt.s32.totalorder %s36, 1
          %s1502 = scalar_select %p1501, %s36, 1
          %s1503 = smul.addr %s1502, 8
          %s1504 = scalar_lea.vmem %s18, %s1503
        $region116: #{text_residual_attention_block.1} parent=111 // pred_fallthru
          _
      $region112: #{text_residual_attention_block.1} parent=5 // pred_fallthru
        _
    $region6: #{text_residual_attention_block.1} parent=1 // loop_footer
      %s29 = sadd.s32 1, %s25
    $region7: #{text_residual_attention_block.1} parent=1 // loop_footer_branch
      %24 = sbr.rel target = $region3
    $region8: #{text_residual_attention_block.1} parent=1 // loop_exit
      _
    %1505 = vsyncpa [#allocation5], 1
    %s1506 = scalar_lea.sflag [#allocation5], 1
    %1507 = vsyncpa %s1506, 1

</llo_original>
